<compile_context>
chip_gen: v7x
topology: tpu7x:2x2x1
jax: 0.10.0
libtpu: 0.0.40
codegen_flags: <defaults>
</compile_context>

<pallas_src>
import functools

import jax
import jax.numpy as jnp
from jax import lax
from jax.experimental import pallas as pl
from jax.experimental.pallas import tpu as pltpu

KSIZE = 7
PAD = 3


def _sam_kernel(w_ref, col_ref, x_ref, o_ref, *, H, W, CB):
    """One grid step: Nb full images, everything lane-dense on the flattened H*W axis.

    w_ref:   SMEM (2*7*7,) f32   flattened Conv2d(2, 1, 7, bias=False) weight
    col_ref: VMEM (1, H*W) i32   column index (p % W) for every flat position
    x_ref:   VMEM (Nb, C, H*W)
    o_ref:   VMEM (Nb, C, H*W)
    """
    Nb, C, HW = x_ref.shape
    nchunks = C // CB

    # Hoisted SMEM scalar reads of all 98 conv weights.
    wv = [w_ref[k] for k in range(2 * KSIZE * KSIZE)]

    col = col_ref[...]                                   # (1, HW) int32, = p % W
    pos = lax.broadcasted_iota(jnp.int32, (1, HW), 1)    # flat position index
    inv_c = jnp.float32(1.0 / C)

    for b in range(Nb):
        # ---- channel max / mean, streamed over channel chunks (lane-dense) ----
        rmax = None
        rsum = None
        for ci in range(nchunks):
            xc = x_ref[b, ci * CB:(ci + 1) * CB, :].astype(jnp.float32)   # (CB, HW)
            cmax = jnp.max(xc, axis=0, keepdims=True)                     # (1, HW)
            csum = jnp.sum(xc, axis=0, keepdims=True)
            rmax = cmax if rmax is None else jnp.maximum(rmax, cmax)
            rsum = csum if rsum is None else rsum + csum
        ravg = rsum * inv_c

        # ---- 7x7 "same" conv (2 -> 1, no bias) on the flat attention planes ----
        # out[p] = sum_{dh,dw in [-3,3]} w[dh+3, dw+3] * F(i+dh, j+dw), F zero-padded,
        # p = i*W + j.  Column shifts are lane rolls by dw (masked at row boundaries);
        # row shifts are lane rolls by dh*W (masked at image top/bottom).
        att = None
        for c, plane in enumerate((rmax, ravg)):
            # g[dw+3][p] == F(i, j+dw)
            g = []
            for dw in range(-PAD, PAD + 1):
                sh = plane if dw == 0 else pltpu.roll(plane, (-dw) % HW, axis=1)
                if dw > 0:
                    sh = jnp.where(col < (W - dw), sh, 0.0)
                elif dw < 0:
                    sh = jnp.where(col >= (-dw), sh, 0.0)
                g.append(sh)
            for dh in range(-PAD, PAD + 1):
                s = None
                for dw in range(-PAD, PAD + 1):
                    wk = wv[c * KSIZE * KSIZE + (dh + PAD) * KSIZE + (dw + PAD)]
                    t = g[dw + PAD] * wk
                    s = t if s is None else s + t
                if dh != 0:
                    s = pltpu.roll(s, (-dh * W) % HW, axis=1)
                    if dh > 0:
                        s = jnp.where(pos < (H - dh) * W, s, 0.0)
                    else:
                        s = jnp.where(pos >= (-dh) * W, s, 0.0)
                att = s if att is None else att + s

        # ---- output = attention * x, streamed over channel chunks (lane-dense) ----
        for ci in range(nchunks):
            sl = slice(ci * CB, (ci + 1) * CB)
            xc = x_ref[b, sl, :].astype(jnp.float32)
            o_ref[b, sl, :] = (xc * att).astype(o_ref.dtype)


def _images_per_step(n, per_image_bytes):
    """Aim for >= ~512 KiB per grid step when images are tiny, but keep >= 2 grid
    steps (when N >= 2) so dual-TensorCore chips get parallel work."""
    target = 512 * 1024
    nb = max(1, min(n, target // max(per_image_bytes, 1)))
    while n % nb:
        nb -= 1
    while nb > 1 and (n // nb) < 2:
        nb -= 1
        while n % nb:
            nb -= 1
    return nb


def sam_forward(x, w):
    """x: (N, C, H, W); w: (1, 2, 7, 7) conv weight (no bias).  Returns SAM(x)."""
    N, C, H, W = x.shape
    HW = H * W
    itemsize = x.dtype.itemsize

    x_flat = x.reshape(N, C, HW)
    w_flat = w.reshape(-1).astype(jnp.float32)                        # (98,) SMEM scalars
    col_ids = (jnp.arange(HW, dtype=jnp.int32) % W).reshape(1, HW)    # p % W

    nb = _images_per_step(N, C * HW * itemsize)
    cb = 8 if C % 8 == 0 else C                                       # channel chunk size

    block_bytes = nb * C * HW * itemsize
    # double-buffered input + double-buffered output + headroom for in-kernel values.
    vmem_limit = int(max(4 * block_bytes + (2 << 20), 32 * 1024 * 1024))

    kernel = functools.partial(_sam_kernel, H=H, W=W, CB=cb)

    out_flat = pl.pallas_call(
        kernel,
        out_shape=jax.ShapeDtypeStruct((N, C, HW), x.dtype),
        grid_spec=pltpu.PrefetchScalarGridSpec(
            num_scalar_prefetch=0,
            grid=(N // nb,),
            in_specs=[
                pl.BlockSpec(memory_space=pltpu.MemorySpace.SMEM),     # conv weights
                pl.BlockSpec((1, HW), lambda n: (0, 0)),               # column indices
                pl.BlockSpec((nb, C, HW), lambda n: (n, 0, 0)),        # x
            ],
            out_specs=pl.BlockSpec((nb, C, HW), lambda n: (n, 0, 0)),
        ),
        compiler_params=pltpu.CompilerParams(
            dimension_semantics=("parallel",),
            vmem_limit_bytes=vmem_limit,
        ),
    )(w_flat, col_ids, x_flat)
    return out_flat.reshape(N, C, H, W)


def sam_reference(x, w):
    """Pure-JAX reference mirroring the PyTorch forward."""
    mx = jnp.max(x, axis=1, keepdims=True)
    av = jnp.mean(x, axis=1, keepdims=True)
    concat = jnp.concatenate([mx, av], axis=1)                         # (N, 2, H, W)
    conv = lax.conv_general_dilated(
        concat, w, window_strides=(1, 1), padding=[(PAD, PAD), (PAD, PAD)],
        dimension_numbers=("NCHW", "OIHW", "NCHW"))
    return conv * x


if __name__ == "__main__":
    key = jax.random.PRNGKey(0)
    kx, kw = jax.random.split(key)

    N, C, H, W = 2, 4, 16, 16
    x = jax.random.normal(kx, (N, C, H, W), dtype=jnp.float32)
    # Deterministic Conv2d(2, 1, 7, bias=False)-shaped weight.
    fan_in = 2 * KSIZE * KSIZE
    bound = 1.0 / (fan_in ** 0.5)
    w = jax.random.uniform(kw, (1, 2, KSIZE, KSIZE), jnp.float32,
                           minval=-bound, maxval=bound)

    out = jax.block_until_ready(sam_forward(x, w))
    ref = sam_reference(x, w)
    assert out.shape == (N, C, H, W)
    err = float(jnp.max(jnp.abs(out - ref)))
    assert err < 1e-4, f"max abs err {err}"
    print("KERNEL_OK")
</pallas_src>

<mosaic_0001>
module attributes {stable_mosaic.version = 11 : i64} {
  func.func @_sam_kernel(%arg0: i32, %arg1: memref<98xf32, #tpu.memory_space<smem>>, %arg2: memref<1x256xi32, #tpu.memory_space<vmem>>, %arg3: memref<1x4x256xf32, #tpu.memory_space<vmem>>, %arg4: memref<1x4x256xf32, #tpu.memory_space<vmem>>) attributes {dimension_semantics = [#tpu.dimension_semantics<parallel>], iteration_bounds = array<i64: 2>, scalar_prefetch = 0 : i64, scratch_operands = 0 : i64, tpu.core_type = #tpu.core_type<tc>, window_params = [{transform_indices = @transform_0, window_bounds = array<i64: 98>}, {pipeline_mode = #tpu.pipeline_mode<synchronous>, transform_indices = @transform_1, window_bounds = array<i64: 1, 256>}, {transform_indices = @transform_2, window_bounds = array<i64: 1, 4, 256>}, {transform_indices = @transform_3, window_bounds = array<i64: 1, 4, 256>}]} {
    %c0 = arith.constant 0 : index
    %0 = memref.load %arg1[%c0] : memref<98xf32, #tpu.memory_space<smem>>
    %c1 = arith.constant 1 : index
    %1 = memref.load %arg1[%c1] : memref<98xf32, #tpu.memory_space<smem>>
    %c2 = arith.constant 2 : index
    %2 = memref.load %arg1[%c2] : memref<98xf32, #tpu.memory_space<smem>>
    %c3 = arith.constant 3 : index
    %3 = memref.load %arg1[%c3] : memref<98xf32, #tpu.memory_space<smem>>
    %c4 = arith.constant 4 : index
    %4 = memref.load %arg1[%c4] : memref<98xf32, #tpu.memory_space<smem>>
    %c5 = arith.constant 5 : index
    %5 = memref.load %arg1[%c5] : memref<98xf32, #tpu.memory_space<smem>>
    %c6 = arith.constant 6 : index
    %6 = memref.load %arg1[%c6] : memref<98xf32, #tpu.memory_space<smem>>
    %c7 = arith.constant 7 : index
    %7 = memref.load %arg1[%c7] : memref<98xf32, #tpu.memory_space<smem>>
    %c8 = arith.constant 8 : index
    %8 = memref.load %arg1[%c8] : memref<98xf32, #tpu.memory_space<smem>>
    %c9 = arith.constant 9 : index
    %9 = memref.load %arg1[%c9] : memref<98xf32, #tpu.memory_space<smem>>
    %c10 = arith.constant 10 : index
    %10 = memref.load %arg1[%c10] : memref<98xf32, #tpu.memory_space<smem>>
    %c11 = arith.constant 11 : index
    %11 = memref.load %arg1[%c11] : memref<98xf32, #tpu.memory_space<smem>>
    %c12 = arith.constant 12 : index
    %12 = memref.load %arg1[%c12] : memref<98xf32, #tpu.memory_space<smem>>
    %c13 = arith.constant 13 : index
    %13 = memref.load %arg1[%c13] : memref<98xf32, #tpu.memory_space<smem>>
    %c14 = arith.constant 14 : index
    %14 = memref.load %arg1[%c14] : memref<98xf32, #tpu.memory_space<smem>>
    %c15 = arith.constant 15 : index
    %15 = memref.load %arg1[%c15] : memref<98xf32, #tpu.memory_space<smem>>
    %c16 = arith.constant 16 : index
    %16 = memref.load %arg1[%c16] : memref<98xf32, #tpu.memory_space<smem>>
    %c17 = arith.constant 17 : index
    %17 = memref.load %arg1[%c17] : memref<98xf32, #tpu.memory_space<smem>>
    %c18 = arith.constant 18 : index
    %18 = memref.load %arg1[%c18] : memref<98xf32, #tpu.memory_space<smem>>
    %c19 = arith.constant 19 : index
    %19 = memref.load %arg1[%c19] : memref<98xf32, #tpu.memory_space<smem>>
    %c20 = arith.constant 20 : index
    %20 = memref.load %arg1[%c20] : memref<98xf32, #tpu.memory_space<smem>>
    %c21 = arith.constant 21 : index
    %21 = memref.load %arg1[%c21] : memref<98xf32, #tpu.memory_space<smem>>
    %c22 = arith.constant 22 : index
    %22 = memref.load %arg1[%c22] : memref<98xf32, #tpu.memory_space<smem>>
    %c23 = arith.constant 23 : index
    %23 = memref.load %arg1[%c23] : memref<98xf32, #tpu.memory_space<smem>>
    %c24 = arith.constant 24 : index
    %24 = memref.load %arg1[%c24] : memref<98xf32, #tpu.memory_space<smem>>
    %c25 = arith.constant 25 : index
    %25 = memref.load %arg1[%c25] : memref<98xf32, #tpu.memory_space<smem>>
    %c26 = arith.constant 26 : index
    %26 = memref.load %arg1[%c26] : memref<98xf32, #tpu.memory_space<smem>>
    %c27 = arith.constant 27 : index
    %27 = memref.load %arg1[%c27] : memref<98xf32, #tpu.memory_space<smem>>
    %c28 = arith.constant 28 : index
    %28 = memref.load %arg1[%c28] : memref<98xf32, #tpu.memory_space<smem>>
    %c29 = arith.constant 29 : index
    %29 = memref.load %arg1[%c29] : memref<98xf32, #tpu.memory_space<smem>>
    %c30 = arith.constant 30 : index
    %30 = memref.load %arg1[%c30] : memref<98xf32, #tpu.memory_space<smem>>
    %c31 = arith.constant 31 : index
    %31 = memref.load %arg1[%c31] : memref<98xf32, #tpu.memory_space<smem>>
    %c32 = arith.constant 32 : index
    %32 = memref.load %arg1[%c32] : memref<98xf32, #tpu.memory_space<smem>>
    %c33 = arith.constant 33 : index
    %33 = memref.load %arg1[%c33] : memref<98xf32, #tpu.memory_space<smem>>
    %c34 = arith.constant 34 : index
    %34 = memref.load %arg1[%c34] : memref<98xf32, #tpu.memory_space<smem>>
    %c35 = arith.constant 35 : index
    %35 = memref.load %arg1[%c35] : memref<98xf32, #tpu.memory_space<smem>>
    %c36 = arith.constant 36 : index
    %36 = memref.load %arg1[%c36] : memref<98xf32, #tpu.memory_space<smem>>
    %c37 = arith.constant 37 : index
    %37 = memref.load %arg1[%c37] : memref<98xf32, #tpu.memory_space<smem>>
    %c38 = arith.constant 38 : index
    %38 = memref.load %arg1[%c38] : memref<98xf32, #tpu.memory_space<smem>>
    %c39 = arith.constant 39 : index
    %39 = memref.load %arg1[%c39] : memref<98xf32, #tpu.memory_space<smem>>
    %c40 = arith.constant 40 : index
    %40 = memref.load %arg1[%c40] : memref<98xf32, #tpu.memory_space<smem>>
    %c41 = arith.constant 41 : index
    %41 = memref.load %arg1[%c41] : memref<98xf32, #tpu.memory_space<smem>>
    %c42 = arith.constant 42 : index
    %42 = memref.load %arg1[%c42] : memref<98xf32, #tpu.memory_space<smem>>
    %c43 = arith.constant 43 : index
    %43 = memref.load %arg1[%c43] : memref<98xf32, #tpu.memory_space<smem>>
    %c44 = arith.constant 44 : index
    %44 = memref.load %arg1[%c44] : memref<98xf32, #tpu.memory_space<smem>>
    %c45 = arith.constant 45 : index
    %45 = memref.load %arg1[%c45] : memref<98xf32, #tpu.memory_space<smem>>
    %c46 = arith.constant 46 : index
    %46 = memref.load %arg1[%c46] : memref<98xf32, #tpu.memory_space<smem>>
    %c47 = arith.constant 47 : index
    %47 = memref.load %arg1[%c47] : memref<98xf32, #tpu.memory_space<smem>>
    %c48 = arith.constant 48 : index
    %48 = memref.load %arg1[%c48] : memref<98xf32, #tpu.memory_space<smem>>
    %c49 = arith.constant 49 : index
    %49 = memref.load %arg1[%c49] : memref<98xf32, #tpu.memory_space<smem>>
    %c50 = arith.constant 50 : index
    %50 = memref.load %arg1[%c50] : memref<98xf32, #tpu.memory_space<smem>>
    %c51 = arith.constant 51 : index
    %51 = memref.load %arg1[%c51] : memref<98xf32, #tpu.memory_space<smem>>
    %c52 = arith.constant 52 : index
    %52 = memref.load %arg1[%c52] : memref<98xf32, #tpu.memory_space<smem>>
    %c53 = arith.constant 53 : index
    %53 = memref.load %arg1[%c53] : memref<98xf32, #tpu.memory_space<smem>>
    %c54 = arith.constant 54 : index
    %54 = memref.load %arg1[%c54] : memref<98xf32, #tpu.memory_space<smem>>
    %c55 = arith.constant 55 : index
    %55 = memref.load %arg1[%c55] : memref<98xf32, #tpu.memory_space<smem>>
    %c56 = arith.constant 56 : index
    %56 = memref.load %arg1[%c56] : memref<98xf32, #tpu.memory_space<smem>>
    %c57 = arith.constant 57 : index
    %57 = memref.load %arg1[%c57] : memref<98xf32, #tpu.memory_space<smem>>
    %c58 = arith.constant 58 : index
    %58 = memref.load %arg1[%c58] : memref<98xf32, #tpu.memory_space<smem>>
    %c59 = arith.constant 59 : index
    %59 = memref.load %arg1[%c59] : memref<98xf32, #tpu.memory_space<smem>>
    %c60 = arith.constant 60 : index
    %60 = memref.load %arg1[%c60] : memref<98xf32, #tpu.memory_space<smem>>
    %c61 = arith.constant 61 : index
    %61 = memref.load %arg1[%c61] : memref<98xf32, #tpu.memory_space<smem>>
    %c62 = arith.constant 62 : index
    %62 = memref.load %arg1[%c62] : memref<98xf32, #tpu.memory_space<smem>>
    %c63 = arith.constant 63 : index
    %63 = memref.load %arg1[%c63] : memref<98xf32, #tpu.memory_space<smem>>
    %c64 = arith.constant 64 : index
    %64 = memref.load %arg1[%c64] : memref<98xf32, #tpu.memory_space<smem>>
    %c65 = arith.constant 65 : index
    %65 = memref.load %arg1[%c65] : memref<98xf32, #tpu.memory_space<smem>>
    %c66 = arith.constant 66 : index
    %66 = memref.load %arg1[%c66] : memref<98xf32, #tpu.memory_space<smem>>
    %c67 = arith.constant 67 : index
    %67 = memref.load %arg1[%c67] : memref<98xf32, #tpu.memory_space<smem>>
    %c68 = arith.constant 68 : index
    %68 = memref.load %arg1[%c68] : memref<98xf32, #tpu.memory_space<smem>>
    %c69 = arith.constant 69 : index
    %69 = memref.load %arg1[%c69] : memref<98xf32, #tpu.memory_space<smem>>
    %c70 = arith.constant 70 : index
    %70 = memref.load %arg1[%c70] : memref<98xf32, #tpu.memory_space<smem>>
    %c71 = arith.constant 71 : index
    %71 = memref.load %arg1[%c71] : memref<98xf32, #tpu.memory_space<smem>>
    %c72 = arith.constant 72 : index
    %72 = memref.load %arg1[%c72] : memref<98xf32, #tpu.memory_space<smem>>
    %c73 = arith.constant 73 : index
    %73 = memref.load %arg1[%c73] : memref<98xf32, #tpu.memory_space<smem>>
    %c74 = arith.constant 74 : index
    %74 = memref.load %arg1[%c74] : memref<98xf32, #tpu.memory_space<smem>>
    %c75 = arith.constant 75 : index
    %75 = memref.load %arg1[%c75] : memref<98xf32, #tpu.memory_space<smem>>
    %c76 = arith.constant 76 : index
    %76 = memref.load %arg1[%c76] : memref<98xf32, #tpu.memory_space<smem>>
    %c77 = arith.constant 77 : index
    %77 = memref.load %arg1[%c77] : memref<98xf32, #tpu.memory_space<smem>>
    %c78 = arith.constant 78 : index
    %78 = memref.load %arg1[%c78] : memref<98xf32, #tpu.memory_space<smem>>
    %c79 = arith.constant 79 : index
    %79 = memref.load %arg1[%c79] : memref<98xf32, #tpu.memory_space<smem>>
    %c80 = arith.constant 80 : index
    %80 = memref.load %arg1[%c80] : memref<98xf32, #tpu.memory_space<smem>>
    %c81 = arith.constant 81 : index
    %81 = memref.load %arg1[%c81] : memref<98xf32, #tpu.memory_space<smem>>
    %c82 = arith.constant 82 : index
    %82 = memref.load %arg1[%c82] : memref<98xf32, #tpu.memory_space<smem>>
    %c83 = arith.constant 83 : index
    %83 = memref.load %arg1[%c83] : memref<98xf32, #tpu.memory_space<smem>>
    %c84 = arith.constant 84 : index
    %84 = memref.load %arg1[%c84] : memref<98xf32, #tpu.memory_space<smem>>
    %c85 = arith.constant 85 : index
    %85 = memref.load %arg1[%c85] : memref<98xf32, #tpu.memory_space<smem>>
    %c86 = arith.constant 86 : index
    %86 = memref.load %arg1[%c86] : memref<98xf32, #tpu.memory_space<smem>>
    %c87 = arith.constant 87 : index
    %87 = memref.load %arg1[%c87] : memref<98xf32, #tpu.memory_space<smem>>
    %c88 = arith.constant 88 : index
    %88 = memref.load %arg1[%c88] : memref<98xf32, #tpu.memory_space<smem>>
    %c89 = arith.constant 89 : index
    %89 = memref.load %arg1[%c89] : memref<98xf32, #tpu.memory_space<smem>>
    %c90 = arith.constant 90 : index
    %90 = memref.load %arg1[%c90] : memref<98xf32, #tpu.memory_space<smem>>
    %c91 = arith.constant 91 : index
    %91 = memref.load %arg1[%c91] : memref<98xf32, #tpu.memory_space<smem>>
    %c92 = arith.constant 92 : index
    %92 = memref.load %arg1[%c92] : memref<98xf32, #tpu.memory_space<smem>>
    %c93 = arith.constant 93 : index
    %93 = memref.load %arg1[%c93] : memref<98xf32, #tpu.memory_space<smem>>
    %c94 = arith.constant 94 : index
    %94 = memref.load %arg1[%c94] : memref<98xf32, #tpu.memory_space<smem>>
    %c95 = arith.constant 95 : index
    %95 = memref.load %arg1[%c95] : memref<98xf32, #tpu.memory_space<smem>>
    %c96 = arith.constant 96 : index
    %96 = memref.load %arg1[%c96] : memref<98xf32, #tpu.memory_space<smem>>
    %c97 = arith.constant 97 : index
    %97 = memref.load %arg1[%c97] : memref<98xf32, #tpu.memory_space<smem>>
    %c0_0 = arith.constant 0 : index
    %c0_1 = arith.constant 0 : index
    %98 = vector.load %arg2[%c0_0, %c0_1] : memref<1x256xi32, #tpu.memory_space<vmem>>, vector<1x256xi32>
    %99 = tpu.iota {dimensions = array<i32: 1>} : vector<1x256xi32>
    %c0_2 = arith.constant 0 : index
    %c0_3 = arith.constant 0 : index
    %c0_4 = arith.constant 0 : index
    %100 = vector.load %arg3[%c0_2, %c0_3, %c0_4] : memref<1x4x256xf32, #tpu.memory_space<vmem>>, vector<1x4x256xf32>
    %101 = vector.shape_cast %100 : vector<1x4x256xf32> to vector<4x256xf32>
    %cst = arith.constant dense<0xFF800000> : vector<256xf32>
    %102 = vector.multi_reduction <maximumf>, %101, %cst [0] : vector<4x256xf32> to vector<256xf32>
    %103 = vector.shape_cast %102 : vector<256xf32> to vector<1x256xf32>
    %cst_5 = arith.constant dense<0.000000e+00> : vector<256xf32>
    %104 = vector.multi_reduction <add>, %101, %cst_5 [0] : vector<4x256xf32> to vector<256xf32>
    %105 = vector.shape_cast %104 : vector<256xf32> to vector<1x256xf32>
    %cst_6 = arith.constant 2.500000e-01 : f32
    %106 = vector.broadcast %cst_6 : f32 to vector<1x256xf32>
    %107 = arith.mulf %105, %106 : vector<1x256xf32>
    %c3_i32 = arith.constant 3 : i32
    %108 = tpu.dynamic_rotate %103 by %c3_i32 dim 1 : vector<1x256xf32>, i32 -> vector<1x256xf32>
    %c3_i32_7 = arith.constant 3 : i32
    %109 = vector.broadcast %c3_i32_7 : i32 to vector<1x256xi32>
    %110 = arith.cmpi sge, %98, %109 : vector<1x256xi32>
    %cst_8 = arith.constant 0.000000e+00 : f32
    %111 = vector.broadcast %cst_8 : f32 to vector<1x256xf32>
    %112 = arith.select %110, %108, %111 : vector<1x256xi1>, vector<1x256xf32>
    %c2_i32 = arith.constant 2 : i32
    %113 = tpu.dynamic_rotate %103 by %c2_i32 dim 1 : vector<1x256xf32>, i32 -> vector<1x256xf32>
    %c2_i32_9 = arith.constant 2 : i32
    %114 = vector.broadcast %c2_i32_9 : i32 to vector<1x256xi32>
    %115 = arith.cmpi sge, %98, %114 : vector<1x256xi32>
    %cst_10 = arith.constant 0.000000e+00 : f32
    %116 = vector.broadcast %cst_10 : f32 to vector<1x256xf32>
    %117 = arith.select %115, %113, %116 : vector<1x256xi1>, vector<1x256xf32>
    %c1_i32 = arith.constant 1 : i32
    %118 = tpu.dynamic_rotate %103 by %c1_i32 dim 1 : vector<1x256xf32>, i32 -> vector<1x256xf32>
    %c1_i32_11 = arith.constant 1 : i32
    %119 = vector.broadcast %c1_i32_11 : i32 to vector<1x256xi32>
    %120 = arith.cmpi sge, %98, %119 : vector<1x256xi32>
    %cst_12 = arith.constant 0.000000e+00 : f32
    %121 = vector.broadcast %cst_12 : f32 to vector<1x256xf32>
    %122 = arith.select %120, %118, %121 : vector<1x256xi1>, vector<1x256xf32>
    %c255_i32 = arith.constant 255 : i32
    %123 = tpu.dynamic_rotate %103 by %c255_i32 dim 1 : vector<1x256xf32>, i32 -> vector<1x256xf32>
    %c15_i32 = arith.constant 15 : i32
    %124 = vector.broadcast %c15_i32 : i32 to vector<1x256xi32>
    %125 = arith.cmpi slt, %98, %124 : vector<1x256xi32>
    %cst_13 = arith.constant 0.000000e+00 : f32
    %126 = vector.broadcast %cst_13 : f32 to vector<1x256xf32>
    %127 = arith.select %125, %123, %126 : vector<1x256xi1>, vector<1x256xf32>
    %c254_i32 = arith.constant 254 : i32
    %128 = tpu.dynamic_rotate %103 by %c254_i32 dim 1 : vector<1x256xf32>, i32 -> vector<1x256xf32>
    %c14_i32 = arith.constant 14 : i32
    %129 = vector.broadcast %c14_i32 : i32 to vector<1x256xi32>
    %130 = arith.cmpi slt, %98, %129 : vector<1x256xi32>
    %cst_14 = arith.constant 0.000000e+00 : f32
    %131 = vector.broadcast %cst_14 : f32 to vector<1x256xf32>
    %132 = arith.select %130, %128, %131 : vector<1x256xi1>, vector<1x256xf32>
    %c253_i32 = arith.constant 253 : i32
    %133 = tpu.dynamic_rotate %103 by %c253_i32 dim 1 : vector<1x256xf32>, i32 -> vector<1x256xf32>
    %c13_i32 = arith.constant 13 : i32
    %134 = vector.broadcast %c13_i32 : i32 to vector<1x256xi32>
    %135 = arith.cmpi slt, %98, %134 : vector<1x256xi32>
    %cst_15 = arith.constant 0.000000e+00 : f32
    %136 = vector.broadcast %cst_15 : f32 to vector<1x256xf32>
    %137 = arith.select %135, %133, %136 : vector<1x256xi1>, vector<1x256xf32>
    %138 = vector.broadcast %0 : f32 to vector<1x256xf32>
    %139 = arith.mulf %112, %138 : vector<1x256xf32>
    %140 = vector.broadcast %1 : f32 to vector<1x256xf32>
    %141 = arith.mulf %117, %140 : vector<1x256xf32>
    %142 = arith.addf %139, %141 : vector<1x256xf32>
    %143 = vector.broadcast %2 : f32 to vector<1x256xf32>
    %144 = arith.mulf %122, %143 : vector<1x256xf32>
    %145 = arith.addf %142, %144 : vector<1x256xf32>
    %146 = vector.broadcast %3 : f32 to vector<1x256xf32>
    %147 = arith.mulf %103, %146 : vector<1x256xf32>
    %148 = arith.addf %145, %147 : vector<1x256xf32>
    %149 = vector.broadcast %4 : f32 to vector<1x256xf32>
    %150 = arith.mulf %127, %149 : vector<1x256xf32>
    %151 = arith.addf %148, %150 : vector<1x256xf32>
    %152 = vector.broadcast %5 : f32 to vector<1x256xf32>
    %153 = arith.mulf %132, %152 : vector<1x256xf32>
    %154 = arith.addf %151, %153 : vector<1x256xf32>
    %155 = vector.broadcast %6 : f32 to vector<1x256xf32>
    %156 = arith.mulf %137, %155 : vector<1x256xf32>
    %157 = arith.addf %154, %156 : vector<1x256xf32>
    %c48_i32 = arith.constant 48 : i32
    %158 = tpu.dynamic_rotate %157 by %c48_i32 dim 1 : vector<1x256xf32>, i32 -> vector<1x256xf32>
    %c48_i32_16 = arith.constant 48 : i32
    %159 = vector.broadcast %c48_i32_16 : i32 to vector<1x256xi32>
    %160 = arith.cmpi sge, %99, %159 : vector<1x256xi32>
    %cst_17 = arith.constant 0.000000e+00 : f32
    %161 = vector.broadcast %cst_17 : f32 to vector<1x256xf32>
    %162 = arith.select %160, %158, %161 : vector<1x256xi1>, vector<1x256xf32>
    %163 = vector.broadcast %7 : f32 to vector<1x256xf32>
    %164 = arith.mulf %112, %163 : vector<1x256xf32>
    %165 = vector.broadcast %8 : f32 to vector<1x256xf32>
    %166 = arith.mulf %117, %165 : vector<1x256xf32>
    %167 = arith.addf %164, %166 : vector<1x256xf32>
    %168 = vector.broadcast %9 : f32 to vector<1x256xf32>
    %169 = arith.mulf %122, %168 : vector<1x256xf32>
    %170 = arith.addf %167, %169 : vector<1x256xf32>
    %171 = vector.broadcast %10 : f32 to vector<1x256xf32>
    %172 = arith.mulf %103, %171 : vector<1x256xf32>
    %173 = arith.addf %170, %172 : vector<1x256xf32>
    %174 = vector.broadcast %11 : f32 to vector<1x256xf32>
    %175 = arith.mulf %127, %174 : vector<1x256xf32>
    %176 = arith.addf %173, %175 : vector<1x256xf32>
    %177 = vector.broadcast %12 : f32 to vector<1x256xf32>
    %178 = arith.mulf %132, %177 : vector<1x256xf32>
    %179 = arith.addf %176, %178 : vector<1x256xf32>
    %180 = vector.broadcast %13 : f32 to vector<1x256xf32>
    %181 = arith.mulf %137, %180 : vector<1x256xf32>
    %182 = arith.addf %179, %181 : vector<1x256xf32>
    %c32_i32 = arith.constant 32 : i32
    %183 = tpu.dynamic_rotate %182 by %c32_i32 dim 1 : vector<1x256xf32>, i32 -> vector<1x256xf32>
    %c32_i32_18 = arith.constant 32 : i32
    %184 = vector.broadcast %c32_i32_18 : i32 to vector<1x256xi32>
    %185 = arith.cmpi sge, %99, %184 : vector<1x256xi32>
    %cst_19 = arith.constant 0.000000e+00 : f32
    %186 = vector.broadcast %cst_19 : f32 to vector<1x256xf32>
    %187 = arith.select %185, %183, %186 : vector<1x256xi1>, vector<1x256xf32>
    %188 = arith.addf %162, %187 : vector<1x256xf32>
    %189 = vector.broadcast %14 : f32 to vector<1x256xf32>
    %190 = arith.mulf %112, %189 : vector<1x256xf32>
    %191 = vector.broadcast %15 : f32 to vector<1x256xf32>
    %192 = arith.mulf %117, %191 : vector<1x256xf32>
    %193 = arith.addf %190, %192 : vector<1x256xf32>
    %194 = vector.broadcast %16 : f32 to vector<1x256xf32>
    %195 = arith.mulf %122, %194 : vector<1x256xf32>
    %196 = arith.addf %193, %195 : vector<1x256xf32>
    %197 = vector.broadcast %17 : f32 to vector<1x256xf32>
    %198 = arith.mulf %103, %197 : vector<1x256xf32>
    %199 = arith.addf %196, %198 : vector<1x256xf32>
    %200 = vector.broadcast %18 : f32 to vector<1x256xf32>
    %201 = arith.mulf %127, %200 : vector<1x256xf32>
    %202 = arith.addf %199, %201 : vector<1x256xf32>
    %203 = vector.broadcast %19 : f32 to vector<1x256xf32>
    %204 = arith.mulf %132, %203 : vector<1x256xf32>
    %205 = arith.addf %202, %204 : vector<1x256xf32>
    %206 = vector.broadcast %20 : f32 to vector<1x256xf32>
    %207 = arith.mulf %137, %206 : vector<1x256xf32>
    %208 = arith.addf %205, %207 : vector<1x256xf32>
    %c16_i32 = arith.constant 16 : i32
    %209 = tpu.dynamic_rotate %208 by %c16_i32 dim 1 : vector<1x256xf32>, i32 -> vector<1x256xf32>
    %c16_i32_20 = arith.constant 16 : i32
    %210 = vector.broadcast %c16_i32_20 : i32 to vector<1x256xi32>
    %211 = arith.cmpi sge, %99, %210 : vector<1x256xi32>
    %cst_21 = arith.constant 0.000000e+00 : f32
    %212 = vector.broadcast %cst_21 : f32 to vector<1x256xf32>
    %213 = arith.select %211, %209, %212 : vector<1x256xi1>, vector<1x256xf32>
    %214 = arith.addf %188, %213 : vector<1x256xf32>
    %215 = vector.broadcast %21 : f32 to vector<1x256xf32>
    %216 = arith.mulf %112, %215 : vector<1x256xf32>
    %217 = vector.broadcast %22 : f32 to vector<1x256xf32>
    %218 = arith.mulf %117, %217 : vector<1x256xf32>
    %219 = arith.addf %216, %218 : vector<1x256xf32>
    %220 = vector.broadcast %23 : f32 to vector<1x256xf32>
    %221 = arith.mulf %122, %220 : vector<1x256xf32>
    %222 = arith.addf %219, %221 : vector<1x256xf32>
    %223 = vector.broadcast %24 : f32 to vector<1x256xf32>
    %224 = arith.mulf %103, %223 : vector<1x256xf32>
    %225 = arith.addf %222, %224 : vector<1x256xf32>
    %226 = vector.broadcast %25 : f32 to vector<1x256xf32>
    %227 = arith.mulf %127, %226 : vector<1x256xf32>
    %228 = arith.addf %225, %227 : vector<1x256xf32>
    %229 = vector.broadcast %26 : f32 to vector<1x256xf32>
    %230 = arith.mulf %132, %229 : vector<1x256xf32>
    %231 = arith.addf %228, %230 : vector<1x256xf32>
    %232 = vector.broadcast %27 : f32 to vector<1x256xf32>
    %233 = arith.mulf %137, %232 : vector<1x256xf32>
    %234 = arith.addf %231, %233 : vector<1x256xf32>
    %235 = arith.addf %214, %234 : vector<1x256xf32>
    %236 = vector.broadcast %28 : f32 to vector<1x256xf32>
    %237 = arith.mulf %112, %236 : vector<1x256xf32>
    %238 = vector.broadcast %29 : f32 to vector<1x256xf32>
    %239 = arith.mulf %117, %238 : vector<1x256xf32>
    %240 = arith.addf %237, %239 : vector<1x256xf32>
    %241 = vector.broadcast %30 : f32 to vector<1x256xf32>
    %242 = arith.mulf %122, %241 : vector<1x256xf32>
    %243 = arith.addf %240, %242 : vector<1x256xf32>
    %244 = vector.broadcast %31 : f32 to vector<1x256xf32>
    %245 = arith.mulf %103, %244 : vector<1x256xf32>
    %246 = arith.addf %243, %245 : vector<1x256xf32>
    %247 = vector.broadcast %32 : f32 to vector<1x256xf32>
    %248 = arith.mulf %127, %247 : vector<1x256xf32>
    %249 = arith.addf %246, %248 : vector<1x256xf32>
    %250 = vector.broadcast %33 : f32 to vector<1x256xf32>
    %251 = arith.mulf %132, %250 : vector<1x256xf32>
    %252 = arith.addf %249, %251 : vector<1x256xf32>
    %253 = vector.broadcast %34 : f32 to vector<1x256xf32>
    %254 = arith.mulf %137, %253 : vector<1x256xf32>
    %255 = arith.addf %252, %254 : vector<1x256xf32>
    %c240_i32 = arith.constant 240 : i32
    %256 = tpu.dynamic_rotate %255 by %c240_i32 dim 1 : vector<1x256xf32>, i32 -> vector<1x256xf32>
    %c240_i32_22 = arith.constant 240 : i32
    %257 = vector.broadcast %c240_i32_22 : i32 to vector<1x256xi32>
    %258 = arith.cmpi slt, %99, %257 : vector<1x256xi32>
    %cst_23 = arith.constant 0.000000e+00 : f32
    %259 = vector.broadcast %cst_23 : f32 to vector<1x256xf32>
    %260 = arith.select %258, %256, %259 : vector<1x256xi1>, vector<1x256xf32>
    %261 = arith.addf %235, %260 : vector<1x256xf32>
    %262 = vector.broadcast %35 : f32 to vector<1x256xf32>
    %263 = arith.mulf %112, %262 : vector<1x256xf32>
    %264 = vector.broadcast %36 : f32 to vector<1x256xf32>
    %265 = arith.mulf %117, %264 : vector<1x256xf32>
    %266 = arith.addf %263, %265 : vector<1x256xf32>
    %267 = vector.broadcast %37 : f32 to vector<1x256xf32>
    %268 = arith.mulf %122, %267 : vector<1x256xf32>
    %269 = arith.addf %266, %268 : vector<1x256xf32>
    %270 = vector.broadcast %38 : f32 to vector<1x256xf32>
    %271 = arith.mulf %103, %270 : vector<1x256xf32>
    %272 = arith.addf %269, %271 : vector<1x256xf32>
    %273 = vector.broadcast %39 : f32 to vector<1x256xf32>
    %274 = arith.mulf %127, %273 : vector<1x256xf32>
    %275 = arith.addf %272, %274 : vector<1x256xf32>
    %276 = vector.broadcast %40 : f32 to vector<1x256xf32>
    %277 = arith.mulf %132, %276 : vector<1x256xf32>
    %278 = arith.addf %275, %277 : vector<1x256xf32>
    %279 = vector.broadcast %41 : f32 to vector<1x256xf32>
    %280 = arith.mulf %137, %279 : vector<1x256xf32>
    %281 = arith.addf %278, %280 : vector<1x256xf32>
    %c224_i32 = arith.constant 224 : i32
    %282 = tpu.dynamic_rotate %281 by %c224_i32 dim 1 : vector<1x256xf32>, i32 -> vector<1x256xf32>
    %c224_i32_24 = arith.constant 224 : i32
    %283 = vector.broadcast %c224_i32_24 : i32 to vector<1x256xi32>
    %284 = arith.cmpi slt, %99, %283 : vector<1x256xi32>
    %cst_25 = arith.constant 0.000000e+00 : f32
    %285 = vector.broadcast %cst_25 : f32 to vector<1x256xf32>
    %286 = arith.select %284, %282, %285 : vector<1x256xi1>, vector<1x256xf32>
    %287 = arith.addf %261, %286 : vector<1x256xf32>
    %288 = vector.broadcast %42 : f32 to vector<1x256xf32>
    %289 = arith.mulf %112, %288 : vector<1x256xf32>
    %290 = vector.broadcast %43 : f32 to vector<1x256xf32>
    %291 = arith.mulf %117, %290 : vector<1x256xf32>
    %292 = arith.addf %289, %291 : vector<1x256xf32>
    %293 = vector.broadcast %44 : f32 to vector<1x256xf32>
    %294 = arith.mulf %122, %293 : vector<1x256xf32>
    %295 = arith.addf %292, %294 : vector<1x256xf32>
    %296 = vector.broadcast %45 : f32 to vector<1x256xf32>
    %297 = arith.mulf %103, %296 : vector<1x256xf32>
    %298 = arith.addf %295, %297 : vector<1x256xf32>
    %299 = vector.broadcast %46 : f32 to vector<1x256xf32>
    %300 = arith.mulf %127, %299 : vector<1x256xf32>
    %301 = arith.addf %298, %300 : vector<1x256xf32>
    %302 = vector.broadcast %47 : f32 to vector<1x256xf32>
    %303 = arith.mulf %132, %302 : vector<1x256xf32>
    %304 = arith.addf %301, %303 : vector<1x256xf32>
    %305 = vector.broadcast %48 : f32 to vector<1x256xf32>
    %306 = arith.mulf %137, %305 : vector<1x256xf32>
    %307 = arith.addf %304, %306 : vector<1x256xf32>
    %c208_i32 = arith.constant 208 : i32
    %308 = tpu.dynamic_rotate %307 by %c208_i32 dim 1 : vector<1x256xf32>, i32 -> vector<1x256xf32>
    %c208_i32_26 = arith.constant 208 : i32
    %309 = vector.broadcast %c208_i32_26 : i32 to vector<1x256xi32>
    %310 = arith.cmpi slt, %99, %309 : vector<1x256xi32>
    %cst_27 = arith.constant 0.000000e+00 : f32
    %311 = vector.broadcast %cst_27 : f32 to vector<1x256xf32>
    %312 = arith.select %310, %308, %311 : vector<1x256xi1>, vector<1x256xf32>
    %313 = arith.addf %287, %312 : vector<1x256xf32>
    %c3_i32_28 = arith.constant 3 : i32
    %314 = tpu.dynamic_rotate %107 by %c3_i32_28 dim 1 : vector<1x256xf32>, i32 -> vector<1x256xf32>
    %c3_i32_29 = arith.constant 3 : i32
    %315 = vector.broadcast %c3_i32_29 : i32 to vector<1x256xi32>
    %316 = arith.cmpi sge, %98, %315 : vector<1x256xi32>
    %cst_30 = arith.constant 0.000000e+00 : f32
    %317 = vector.broadcast %cst_30 : f32 to vector<1x256xf32>
    %318 = arith.select %316, %314, %317 : vector<1x256xi1>, vector<1x256xf32>
    %c2_i32_31 = arith.constant 2 : i32
    %319 = tpu.dynamic_rotate %107 by %c2_i32_31 dim 1 : vector<1x256xf32>, i32 -> vector<1x256xf32>
    %c2_i32_32 = arith.constant 2 : i32
    %320 = vector.broadcast %c2_i32_32 : i32 to vector<1x256xi32>
    %321 = arith.cmpi sge, %98, %320 : vector<1x256xi32>
    %cst_33 = arith.constant 0.000000e+00 : f32
    %322 = vector.broadcast %cst_33 : f32 to vector<1x256xf32>
    %323 = arith.select %321, %319, %322 : vector<1x256xi1>, vector<1x256xf32>
    %c1_i32_34 = arith.constant 1 : i32
    %324 = tpu.dynamic_rotate %107 by %c1_i32_34 dim 1 : vector<1x256xf32>, i32 -> vector<1x256xf32>
    %c1_i32_35 = arith.constant 1 : i32
    %325 = vector.broadcast %c1_i32_35 : i32 to vector<1x256xi32>
    %326 = arith.cmpi sge, %98, %325 : vector<1x256xi32>
    %cst_36 = arith.constant 0.000000e+00 : f32
    %327 = vector.broadcast %cst_36 : f32 to vector<1x256xf32>
    %328 = arith.select %326, %324, %327 : vector<1x256xi1>, vector<1x256xf32>
    %c255_i32_37 = arith.constant 255 : i32
    %329 = tpu.dynamic_rotate %107 by %c255_i32_37 dim 1 : vector<1x256xf32>, i32 -> vector<1x256xf32>
    %c15_i32_38 = arith.constant 15 : i32
    %330 = vector.broadcast %c15_i32_38 : i32 to vector<1x256xi32>
    %331 = arith.cmpi slt, %98, %330 : vector<1x256xi32>
    %cst_39 = arith.constant 0.000000e+00 : f32
    %332 = vector.broadcast %cst_39 : f32 to vector<1x256xf32>
    %333 = arith.select %331, %329, %332 : vector<1x256xi1>, vector<1x256xf32>
    %c254_i32_40 = arith.constant 254 : i32
    %334 = tpu.dynamic_rotate %107 by %c254_i32_40 dim 1 : vector<1x256xf32>, i32 -> vector<1x256xf32>
    %c14_i32_41 = arith.constant 14 : i32
    %335 = vector.broadcast %c14_i32_41 : i32 to vector<1x256xi32>
    %336 = arith.cmpi slt, %98, %335 : vector<1x256xi32>
    %cst_42 = arith.constant 0.000000e+00 : f32
    %337 = vector.broadcast %cst_42 : f32 to vector<1x256xf32>
    %338 = arith.select %336, %334, %337 : vector<1x256xi1>, vector<1x256xf32>
    %c253_i32_43 = arith.constant 253 : i32
    %339 = tpu.dynamic_rotate %107 by %c253_i32_43 dim 1 : vector<1x256xf32>, i32 -> vector<1x256xf32>
    %c13_i32_44 = arith.constant 13 : i32
    %340 = vector.broadcast %c13_i32_44 : i32 to vector<1x256xi32>
    %341 = arith.cmpi slt, %98, %340 : vector<1x256xi32>
    %cst_45 = arith.constant 0.000000e+00 : f32
    %342 = vector.broadcast %cst_45 : f32 to vector<1x256xf32>
    %343 = arith.select %341, %339, %342 : vector<1x256xi1>, vector<1x256xf32>
    %344 = vector.broadcast %49 : f32 to vector<1x256xf32>
    %345 = arith.mulf %318, %344 : vector<1x256xf32>
    %346 = vector.broadcast %50 : f32 to vector<1x256xf32>
    %347 = arith.mulf %323, %346 : vector<1x256xf32>
    %348 = arith.addf %345, %347 : vector<1x256xf32>
    %349 = vector.broadcast %51 : f32 to vector<1x256xf32>
    %350 = arith.mulf %328, %349 : vector<1x256xf32>
    %351 = arith.addf %348, %350 : vector<1x256xf32>
    %352 = vector.broadcast %52 : f32 to vector<1x256xf32>
    %353 = arith.mulf %107, %352 : vector<1x256xf32>
    %354 = arith.addf %351, %353 : vector<1x256xf32>
    %355 = vector.broadcast %53 : f32 to vector<1x256xf32>
    %356 = arith.mulf %333, %355 : vector<1x256xf32>
    %357 = arith.addf %354, %356 : vector<1x256xf32>
    %358 = vector.broadcast %54 : f32 to vector<1x256xf32>
    %359 = arith.mulf %338, %358 : vector<1x256xf32>
    %360 = arith.addf %357, %359 : vector<1x256xf32>
    %361 = vector.broadcast %55 : f32 to vector<1x256xf32>
    %362 = arith.mulf %343, %361 : vector<1x256xf32>
    %363 = arith.addf %360, %362 : vector<1x256xf32>
    %c48_i32_46 = arith.constant 48 : i32
    %364 = tpu.dynamic_rotate %363 by %c48_i32_46 dim 1 : vector<1x256xf32>, i32 -> vector<1x256xf32>
    %c48_i32_47 = arith.constant 48 : i32
    %365 = vector.broadcast %c48_i32_47 : i32 to vector<1x256xi32>
    %366 = arith.cmpi sge, %99, %365 : vector<1x256xi32>
    %cst_48 = arith.constant 0.000000e+00 : f32
    %367 = vector.broadcast %cst_48 : f32 to vector<1x256xf32>
    %368 = arith.select %366, %364, %367 : vector<1x256xi1>, vector<1x256xf32>
    %369 = arith.addf %313, %368 : vector<1x256xf32>
    %370 = vector.broadcast %56 : f32 to vector<1x256xf32>
    %371 = arith.mulf %318, %370 : vector<1x256xf32>
    %372 = vector.broadcast %57 : f32 to vector<1x256xf32>
    %373 = arith.mulf %323, %372 : vector<1x256xf32>
    %374 = arith.addf %371, %373 : vector<1x256xf32>
    %375 = vector.broadcast %58 : f32 to vector<1x256xf32>
    %376 = arith.mulf %328, %375 : vector<1x256xf32>
    %377 = arith.addf %374, %376 : vector<1x256xf32>
    %378 = vector.broadcast %59 : f32 to vector<1x256xf32>
    %379 = arith.mulf %107, %378 : vector<1x256xf32>
    %380 = arith.addf %377, %379 : vector<1x256xf32>
    %381 = vector.broadcast %60 : f32 to vector<1x256xf32>
    %382 = arith.mulf %333, %381 : vector<1x256xf32>
    %383 = arith.addf %380, %382 : vector<1x256xf32>
    %384 = vector.broadcast %61 : f32 to vector<1x256xf32>
    %385 = arith.mulf %338, %384 : vector<1x256xf32>
    %386 = arith.addf %383, %385 : vector<1x256xf32>
    %387 = vector.broadcast %62 : f32 to vector<1x256xf32>
    %388 = arith.mulf %343, %387 : vector<1x256xf32>
    %389 = arith.addf %386, %388 : vector<1x256xf32>
    %c32_i32_49 = arith.constant 32 : i32
    %390 = tpu.dynamic_rotate %389 by %c32_i32_49 dim 1 : vector<1x256xf32>, i32 -> vector<1x256xf32>
    %c32_i32_50 = arith.constant 32 : i32
    %391 = vector.broadcast %c32_i32_50 : i32 to vector<1x256xi32>
    %392 = arith.cmpi sge, %99, %391 : vector<1x256xi32>
    %cst_51 = arith.constant 0.000000e+00 : f32
    %393 = vector.broadcast %cst_51 : f32 to vector<1x256xf32>
    %394 = arith.select %392, %390, %393 : vector<1x256xi1>, vector<1x256xf32>
    %395 = arith.addf %369, %394 : vector<1x256xf32>
    %396 = vector.broadcast %63 : f32 to vector<1x256xf32>
    %397 = arith.mulf %318, %396 : vector<1x256xf32>
    %398 = vector.broadcast %64 : f32 to vector<1x256xf32>
    %399 = arith.mulf %323, %398 : vector<1x256xf32>
    %400 = arith.addf %397, %399 : vector<1x256xf32>
    %401 = vector.broadcast %65 : f32 to vector<1x256xf32>
    %402 = arith.mulf %328, %401 : vector<1x256xf32>
    %403 = arith.addf %400, %402 : vector<1x256xf32>
    %404 = vector.broadcast %66 : f32 to vector<1x256xf32>
    %405 = arith.mulf %107, %404 : vector<1x256xf32>
    %406 = arith.addf %403, %405 : vector<1x256xf32>
    %407 = vector.broadcast %67 : f32 to vector<1x256xf32>
    %408 = arith.mulf %333, %407 : vector<1x256xf32>
    %409 = arith.addf %406, %408 : vector<1x256xf32>
    %410 = vector.broadcast %68 : f32 to vector<1x256xf32>
    %411 = arith.mulf %338, %410 : vector<1x256xf32>
    %412 = arith.addf %409, %411 : vector<1x256xf32>
    %413 = vector.broadcast %69 : f32 to vector<1x256xf32>
    %414 = arith.mulf %343, %413 : vector<1x256xf32>
    %415 = arith.addf %412, %414 : vector<1x256xf32>
    %c16_i32_52 = arith.constant 16 : i32
    %416 = tpu.dynamic_rotate %415 by %c16_i32_52 dim 1 : vector<1x256xf32>, i32 -> vector<1x256xf32>
    %c16_i32_53 = arith.constant 16 : i32
    %417 = vector.broadcast %c16_i32_53 : i32 to vector<1x256xi32>
    %418 = arith.cmpi sge, %99, %417 : vector<1x256xi32>
    %cst_54 = arith.constant 0.000000e+00 : f32
    %419 = vector.broadcast %cst_54 : f32 to vector<1x256xf32>
    %420 = arith.select %418, %416, %419 : vector<1x256xi1>, vector<1x256xf32>
    %421 = arith.addf %395, %420 : vector<1x256xf32>
    %422 = vector.broadcast %70 : f32 to vector<1x256xf32>
    %423 = arith.mulf %318, %422 : vector<1x256xf32>
    %424 = vector.broadcast %71 : f32 to vector<1x256xf32>
    %425 = arith.mulf %323, %424 : vector<1x256xf32>
    %426 = arith.addf %423, %425 : vector<1x256xf32>
    %427 = vector.broadcast %72 : f32 to vector<1x256xf32>
    %428 = arith.mulf %328, %427 : vector<1x256xf32>
    %429 = arith.addf %426, %428 : vector<1x256xf32>
    %430 = vector.broadcast %73 : f32 to vector<1x256xf32>
    %431 = arith.mulf %107, %430 : vector<1x256xf32>
    %432 = arith.addf %429, %431 : vector<1x256xf32>
    %433 = vector.broadcast %74 : f32 to vector<1x256xf32>
    %434 = arith.mulf %333, %433 : vector<1x256xf32>
    %435 = arith.addf %432, %434 : vector<1x256xf32>
    %436 = vector.broadcast %75 : f32 to vector<1x256xf32>
    %437 = arith.mulf %338, %436 : vector<1x256xf32>
    %438 = arith.addf %435, %437 : vector<1x256xf32>
    %439 = vector.broadcast %76 : f32 to vector<1x256xf32>
    %440 = arith.mulf %343, %439 : vector<1x256xf32>
    %441 = arith.addf %438, %440 : vector<1x256xf32>
    %442 = arith.addf %421, %441 : vector<1x256xf32>
    %443 = vector.broadcast %77 : f32 to vector<1x256xf32>
    %444 = arith.mulf %318, %443 : vector<1x256xf32>
    %445 = vector.broadcast %78 : f32 to vector<1x256xf32>
    %446 = arith.mulf %323, %445 : vector<1x256xf32>
    %447 = arith.addf %444, %446 : vector<1x256xf32>
    %448 = vector.broadcast %79 : f32 to vector<1x256xf32>
    %449 = arith.mulf %328, %448 : vector<1x256xf32>
    %450 = arith.addf %447, %449 : vector<1x256xf32>
    %451 = vector.broadcast %80 : f32 to vector<1x256xf32>
    %452 = arith.mulf %107, %451 : vector<1x256xf32>
    %453 = arith.addf %450, %452 : vector<1x256xf32>
    %454 = vector.broadcast %81 : f32 to vector<1x256xf32>
    %455 = arith.mulf %333, %454 : vector<1x256xf32>
    %456 = arith.addf %453, %455 : vector<1x256xf32>
    %457 = vector.broadcast %82 : f32 to vector<1x256xf32>
    %458 = arith.mulf %338, %457 : vector<1x256xf32>
    %459 = arith.addf %456, %458 : vector<1x256xf32>
    %460 = vector.broadcast %83 : f32 to vector<1x256xf32>
    %461 = arith.mulf %343, %460 : vector<1x256xf32>
    %462 = arith.addf %459, %461 : vector<1x256xf32>
    %c240_i32_55 = arith.constant 240 : i32
    %463 = tpu.dynamic_rotate %462 by %c240_i32_55 dim 1 : vector<1x256xf32>, i32 -> vector<1x256xf32>
    %c240_i32_56 = arith.constant 240 : i32
    %464 = vector.broadcast %c240_i32_56 : i32 to vector<1x256xi32>
    %465 = arith.cmpi slt, %99, %464 : vector<1x256xi32>
    %cst_57 = arith.constant 0.000000e+00 : f32
    %466 = vector.broadcast %cst_57 : f32 to vector<1x256xf32>
    %467 = arith.select %465, %463, %466 : vector<1x256xi1>, vector<1x256xf32>
    %468 = arith.addf %442, %467 : vector<1x256xf32>
    %469 = vector.broadcast %84 : f32 to vector<1x256xf32>
    %470 = arith.mulf %318, %469 : vector<1x256xf32>
    %471 = vector.broadcast %85 : f32 to vector<1x256xf32>
    %472 = arith.mulf %323, %471 : vector<1x256xf32>
    %473 = arith.addf %470, %472 : vector<1x256xf32>
    %474 = vector.broadcast %86 : f32 to vector<1x256xf32>
    %475 = arith.mulf %328, %474 : vector<1x256xf32>
    %476 = arith.addf %473, %475 : vector<1x256xf32>
    %477 = vector.broadcast %87 : f32 to vector<1x256xf32>
    %478 = arith.mulf %107, %477 : vector<1x256xf32>
    %479 = arith.addf %476, %478 : vector<1x256xf32>
    %480 = vector.broadcast %88 : f32 to vector<1x256xf32>
    %481 = arith.mulf %333, %480 : vector<1x256xf32>
    %482 = arith.addf %479, %481 : vector<1x256xf32>
    %483 = vector.broadcast %89 : f32 to vector<1x256xf32>
    %484 = arith.mulf %338, %483 : vector<1x256xf32>
    %485 = arith.addf %482, %484 : vector<1x256xf32>
    %486 = vector.broadcast %90 : f32 to vector<1x256xf32>
    %487 = arith.mulf %343, %486 : vector<1x256xf32>
    %488 = arith.addf %485, %487 : vector<1x256xf32>
    %c224_i32_58 = arith.constant 224 : i32
    %489 = tpu.dynamic_rotate %488 by %c224_i32_58 dim 1 : vector<1x256xf32>, i32 -> vector<1x256xf32>
    %c224_i32_59 = arith.constant 224 : i32
    %490 = vector.broadcast %c224_i32_59 : i32 to vector<1x256xi32>
    %491 = arith.cmpi slt, %99, %490 : vector<1x256xi32>
    %cst_60 = arith.constant 0.000000e+00 : f32
    %492 = vector.broadcast %cst_60 : f32 to vector<1x256xf32>
    %493 = arith.select %491, %489, %492 : vector<1x256xi1>, vector<1x256xf32>
    %494 = arith.addf %468, %493 : vector<1x256xf32>
    %495 = vector.broadcast %91 : f32 to vector<1x256xf32>
    %496 = arith.mulf %318, %495 : vector<1x256xf32>
    %497 = vector.broadcast %92 : f32 to vector<1x256xf32>
    %498 = arith.mulf %323, %497 : vector<1x256xf32>
    %499 = arith.addf %496, %498 : vector<1x256xf32>
    %500 = vector.broadcast %93 : f32 to vector<1x256xf32>
    %501 = arith.mulf %328, %500 : vector<1x256xf32>
    %502 = arith.addf %499, %501 : vector<1x256xf32>
    %503 = vector.broadcast %94 : f32 to vector<1x256xf32>
    %504 = arith.mulf %107, %503 : vector<1x256xf32>
    %505 = arith.addf %502, %504 : vector<1x256xf32>
    %506 = vector.broadcast %95 : f32 to vector<1x256xf32>
    %507 = arith.mulf %333, %506 : vector<1x256xf32>
    %508 = arith.addf %505, %507 : vector<1x256xf32>
    %509 = vector.broadcast %96 : f32 to vector<1x256xf32>
    %510 = arith.mulf %338, %509 : vector<1x256xf32>
    %511 = arith.addf %508, %510 : vector<1x256xf32>
    %512 = vector.broadcast %97 : f32 to vector<1x256xf32>
    %513 = arith.mulf %343, %512 : vector<1x256xf32>
    %514 = arith.addf %511, %513 : vector<1x256xf32>
    %c208_i32_61 = arith.constant 208 : i32
    %515 = tpu.dynamic_rotate %514 by %c208_i32_61 dim 1 : vector<1x256xf32>, i32 -> vector<1x256xf32>
    %c208_i32_62 = arith.constant 208 : i32
    %516 = vector.broadcast %c208_i32_62 : i32 to vector<1x256xi32>
    %517 = arith.cmpi slt, %99, %516 : vector<1x256xi32>
    %cst_63 = arith.constant 0.000000e+00 : f32
    %518 = vector.broadcast %cst_63 : f32 to vector<1x256xf32>
    %519 = arith.select %517, %515, %518 : vector<1x256xi1>, vector<1x256xf32>
    %520 = arith.addf %494, %519 : vector<1x256xf32>
    %c0_64 = arith.constant 0 : index
    %c0_65 = arith.constant 0 : index
    %c0_66 = arith.constant 0 : index
    %521 = vector.load %arg3[%c0_64, %c0_65, %c0_66] : memref<1x4x256xf32, #tpu.memory_space<vmem>>, vector<1x4x256xf32>
    %522 = vector.shape_cast %521 : vector<1x4x256xf32> to vector<4x256xf32>
    %523 = vector.broadcast %520 : vector<1x256xf32> to vector<4x256xf32>
    %524 = arith.mulf %522, %523 : vector<4x256xf32>
    %c0_67 = arith.constant 0 : index
    %c0_68 = arith.constant 0 : index
    %c0_69 = arith.constant 0 : index
    %525 = vector.load %arg4[%c0_67, %c0_68, %c0_69] : memref<1x4x256xf32, #tpu.memory_space<vmem>>, vector<1x4x256xf32>
    %526 = vector.shape_cast %525 : vector<1x4x256xf32> to vector<4x256xf32>
    %527 = vector.shape_cast %524 : vector<4x256xf32> to vector<1x4x256xf32>
    tpu.vector_store %arg4[%c0_67, %c0_68, %c0_69], %527 {strides = array<i32>} : memref<1x4x256xf32, #tpu.memory_space<vmem>>, vector<1x4x256xf32>,
    return
  }
  func.func @transform_0(%arg0: i32) -> i32 {
    %c0_i32 = arith.constant 0 : i32
    %c0_i32_0 = arith.constant 0 : i32
    return %c0_i32 : i32
  }
  func.func @transform_1(%arg0: i32) -> (i32, i32) {
    %c0_i32 = arith.constant 0 : i32
    %c0_i32_0 = arith.constant 0 : i32
    %c0_i32_1 = arith.constant 0 : i32
    return %c0_i32, %c0_i32_0 : i32, i32
  }
  func.func @transform_2(%arg0: i32) -> (i32, i32, i32) {
    %c0_i32 = arith.constant 0 : i32
    %c0_i32_0 = arith.constant 0 : i32
    %c0_i32_1 = arith.constant 0 : i32
    return %arg0, %c0_i32, %c0_i32_0 : i32, i32, i32
  }
  func.func @transform_3(%arg0: i32) -> (i32, i32, i32) {
    %c0_i32 = arith.constant 0 : i32
    %c0_i32_0 = arith.constant 0 : i32
    %c0_i32_1 = arith.constant 0 : i32
    return %arg0, %c0_i32, %c0_i32_0 : i32, i32, i32
  }
}

</mosaic_0001>

<llo_original>
// kernel: tpu_custom_call.1
$region0: #{tpu_custom_call.1}
  #allocation0 [shape = 'u32[]', space=smem, size = 0x4, offset = 0x4, fixed_abs, tag = 'smem constant byte address 0x4 - core index']
  #allocation1 [shape = 'u32[144,128]{1,0:T(1,128)}', space=vmem, size = 0x12000, scoped, tag = 'internal scratch']
  %s0 = inlined_call_operand.hbm [shape: f32[98], index: 0, kind: input, shape index: {}]
  %s1 = inlined_call_operand.vmem [shape: s32[1,256], index: 1, kind: input, shape index: {}]
  %s2 = inlined_call_operand.hbm [shape: f32[2,4,256], index: 2, kind: input, shape index: {}]
  %s3 = inlined_call_operand.hbm [shape: f32[2,4,256], index: 3, kind: output, shape index: {}]
  %s4 = sld [smem:[#allocation0]]
  $region53: #{tpu_custom_call.1} parent=0
    _
  %s6 = ssub.s32 1, %s4
  %s7 = scalar_select 0, %s6, %s4
  $region1: #{tpu_custom_call.1} parent=0
    #allocation2 [shape = 'u8[512]{0}', space=smem, size = 0x200, scoped, tag = 'input window, operand 0, single buffered']
    #allocation3 [shape = 's32[2]{0}', space=sflag, size = 0x8, scoped, tag = 'scoped memory for tpu_custom_call.1']
    #allocation4 [shape = 's32[2]{0}', space=sflag, size = 0x8, scoped, tag = 'scoped memory for tpu_custom_call.1']
    #allocation5 [shape = 's32[2]{0}', space=sflag, size = 0x8, scoped, tag = 'scoped memory for tpu_custom_call.1']
    #allocation6 [shape = 'u8[8192]{0}', space=vmem, size = 0x2000, scoped, tag = 'input window, operand 2']
    #allocation7 [shape = 'u8[8192]{0}', space=vmem, size = 0x2000, scoped, tag = 'output window, operand 0']
    %8 = vsyncpa [#allocation5], 0
    %9 = vsyncpa [#allocation3], 0
    %s10 = scalar_lea.sflag [#allocation3], 1
    %11 = vsyncpa %s10, 0
    %12 = vsyncpa [#allocation4], 0
    %s13 = scalar_lea.sflag [#allocation4], 1
    %14 = vsyncpa %s13, 0
    loop: start=0, step=1, limit=4
    $region2: #{tpu_custom_call.1} parent=1 // loop_pre_header
      _
    $region3: #{tpu_custom_call.1} parent=1 // loop_header
      %s16 = sphi 0, %s20
      %p17 = scmp.ge.s32.totalorder %s16, 4
      %s24 = sphi 0, %s24
      %s26 = sphi 0, %s24
      %s27 = sphi 0, %s26
      %s41 = sphi 0, %s27
      %s45 = sphi 0, %s45
      %s47 = sphi 0, %s45
      %s48 = sphi 0, %s47
      %s62 = sphi 0, %s48
      %s68 = sphi 0, %s70
      %s71 = sphi 0, %s68
      %s72 = sphi 0, %s71
      %s88 = sphi 0, %s72
      %s94 = sphi 0, %s96
      %s97 = sphi 0, %s94
      %s98 = sphi 0, %s97
      %s114 = sphi 0, %s98
    $region4: #{tpu_custom_call.1} parent=1 // loop_header_branch
      %19 = sbr.rel (%p17) target = $region8
    $region5: #{tpu_custom_call.1} parent=1 // loop_body
      %s21 = ssub.s32 %s16, 1
      %s22 = ssub.s32 %s16, 2
      %s23 = sadd.s32 %s16, 1
      %s25 = sadd.s32 %s24, 1
      %p28 = scmp.eq.s32.totalorder %s16, 1
      %p29 = scmp.ne.s32.totalorder %s24, %s26
      %p30 = scmp.eq.s32.totalorder %s16, 0
      %p31 = por %p29, %p30
      %p32 = scmp.ne.s32.totalorder %s24, %s26
      %p33 = scmp.eq.s32.totalorder %s21, 1
      %p34 = por %p32, %p33
      %p35 = scmp.ne.s32.totalorder %s26, %s27
      %p36 = scmp.eq.s32.totalorder %s21, 0
      %p37 = por %p35, %p36
      %p38 = scmp.ne.s32.totalorder %s26, %s27
      %p39 = scmp.eq.s32.totalorder %s22, 1
      %p40 = por %p38, %p39
      %p42 = scmp.ne.s32.totalorder %s27, %s41
      %p43 = scmp.eq.s32.totalorder %s22, 0
      %p44 = por %p42, %p43
      %s46 = sadd.s32 %s45, 1
      %p49 = scmp.eq.s32.totalorder %s16, 1
      %p50 = scmp.ne.s32.totalorder %s45, %s47
      %p51 = scmp.eq.s32.totalorder %s16, 0
      %p52 = por %p50, %p51
      %p53 = scmp.ne.s32.totalorder %s45, %s47
      %p54 = scmp.eq.s32.totalorder %s21, 1
      %p55 = por %p53, %p54
      %p56 = scmp.ne.s32.totalorder %s47, %s48
      %p57 = scmp.eq.s32.totalorder %s21, 0
      %p58 = por %p56, %p57
      %p59 = scmp.ne.s32.totalorder %s47, %s48
      %p60 = scmp.eq.s32.totalorder %s22, 1
      %p61 = por %p59, %p60
      %p63 = scmp.ne.s32.totalorder %s48, %s62
      %p64 = scmp.eq.s32.totalorder %s22, 0
      %p65 = por %p63, %p64
      %s66 = ssub.s32 %s16, %s23
      %p67 = scmp.eq.s32.totalorder %s66, 0
      %s69 = sadd.s32 %s68, 1
      %s70 = scalar_select %p67, %s68, %s69
      %p73 = pneg %p67
      %p74 = scmp.eq.s32.totalorder %s16, 1
      %p75 = por %p73, %p74
      %p76 = scmp.ne.s32.totalorder %s68, %s71
      %p77 = scmp.eq.s32.totalorder %s16, 0
      %p78 = por %p76, %p77
      %p79 = scmp.ne.s32.totalorder %s68, %s71
      %p80 = scmp.eq.s32.totalorder %s21, 1
      %p81 = por %p79, %p80
      %p82 = scmp.ne.s32.totalorder %s71, %s72
      %p83 = scmp.eq.s32.totalorder %s21, 0
      %p84 = por %p82, %p83
      %p85 = scmp.ne.s32.totalorder %s71, %s72
      %p86 = scmp.eq.s32.totalorder %s22, 1
      %p87 = por %p85, %p86
      %p89 = scmp.ne.s32.totalorder %s72, %s88
      %p90 = scmp.eq.s32.totalorder %s22, 0
      %p91 = por %p89, %p90
      %s92 = ssub.s32 %s16, %s23
      %p93 = scmp.eq.s32.totalorder %s92, 0
      %s95 = sadd.s32 %s94, 1
      %s96 = scalar_select %p93, %s94, %s95
      %p99 = pneg %p93
      %p100 = scmp.eq.s32.totalorder %s16, 1
      %p101 = por %p99, %p100
      %p102 = scmp.ne.s32.totalorder %s94, %s97
      %p103 = scmp.eq.s32.totalorder %s16, 0
      %p104 = por %p102, %p103
      %p105 = scmp.ne.s32.totalorder %s94, %s97
      %p106 = scmp.eq.s32.totalorder %s21, 1
      %p107 = por %p105, %p106
      %p108 = scmp.ne.s32.totalorder %s97, %s98
      %p109 = scmp.eq.s32.totalorder %s21, 0
      %p110 = por %p108, %p109
      %p111 = scmp.ne.s32.totalorder %s97, %s98
      %p112 = scmp.eq.s32.totalorder %s22, 1
      %p113 = por %p111, %p112
      %p115 = scmp.ne.s32.totalorder %s98, %s114
      %p116 = scmp.eq.s32.totalorder %s22, 0
      %p117 = por %p115, %p116
      %p118 = scmp.le.s32.totalorder 1, %s16
      %p119 = scmp.lt.s32.totalorder %s16, 3
      %p120 = pnand %p118, %p119
      %p121 = pneg %p120
      // Predicated region
      $region9: #{tpu_custom_call.1} parent=5 // pred_check
        _
      $region10: #{tpu_custom_call.1} parent=5 // pred_check_branch
        %123 = sbr.rel (%p120) target = $region12
      $region11: #{tpu_custom_call.1} parent=5 // pred_region
        %s124 = ssub.s32 %s16, 1
        // Predicated region
        $region13: #{tpu_custom_call.1} parent=11 // pred_check
          %p125 = pneg %p37
        $region14: #{tpu_custom_call.1} parent=11 // pred_check_branch
          %127 = sbr.rel (%p125) target = $region16
        $region15: #{tpu_custom_call.1} parent=11 // pred_region
          %s129 = ssub.s32 16, 16
          %130 = vsyncadd [#allocation5], %s129
          %133 = dma.hbm_to_smem %s0, 16, [#allocation2], [#allocation5]
        $region16: #{tpu_custom_call.1} parent=11 // pred_fallthru
          _
        // Predicated region
        $region17: #{tpu_custom_call.1} parent=11 // pred_check
          %p134 = pneg %p58
        $region18: #{tpu_custom_call.1} parent=11 // pred_check_branch
          %136 = sbr.rel (%p134) target = $region20
        $region19: #{tpu_custom_call.1} parent=11 // pred_region
          _
        $region20: #{tpu_custom_call.1} parent=11 // pred_fallthru
          _
      $region12: #{tpu_custom_call.1} parent=5 // pred_fallthru
        _
      %p137 = scmp.lt.s32.totalorder %s16, 2
      // Predicated region
      $region21: #{tpu_custom_call.1} parent=5 // pred_check
        %p138 = pneg %p137
      $region22: #{tpu_custom_call.1} parent=5 // pred_check_branch
        %140 = sbr.rel (%p138) target = $region24
      $region23: #{tpu_custom_call.1} parent=5 // pred_region
        // Predicated region
        $region25: #{tpu_custom_call.1} parent=23 // pred_check
          %p141 = pneg %p78
        $region26: #{tpu_custom_call.1} parent=23 // pred_check_branch
          %143 = sbr.rel (%p141) target = $region28
        $region27: #{tpu_custom_call.1} parent=23 // pred_region
          %s144 = sand.u32 %s68, 1
          %s145 = scalar_lea.sflag [#allocation3], %s144
          %s146 = sand.u32 %s68, 1
          %s147 = smul.addr %s146, 8
          %s148 = scalar_lea.vmem [#allocation6], %s147
          %s150 = ssub.s32 128, 128
          %151 = vsyncadd %s145, %s150
          %s152 = smul.addr %s16, 2
          %s153 = smul.addr %s152, 64
          %s154 = scalar_lea.hbm %s2, %s153
          %s156 = sshll.u32 %s148, 4
          %s157 = int_to_ptr.vmem [resolvable:$true] %s156
          %159 = dma.hbm_to_vmem [thread:$0]  %s154, 128, %s157, %s145
        $region28: #{tpu_custom_call.1} parent=23 // pred_fallthru
          _
      $region24: #{tpu_custom_call.1} parent=5 // pred_fallthru
        _
      %p160 = scmp.le.s32.totalorder 1, %s16
      %p161 = scmp.lt.s32.totalorder %s16, 3
      %p162 = pnand %p160, %p161
      %p163 = pneg %p162
      // Predicated region
      $region29: #{tpu_custom_call.1} parent=5 // pred_check
        _
      $region30: #{tpu_custom_call.1} parent=5 // pred_check_branch
        %165 = sbr.rel (%p162) target = $region32
      $region31: #{tpu_custom_call.1} parent=5 // pred_region
        %s166 = ssub.s32 %s16, 1
        // Predicated region
        $region33: #{tpu_custom_call.1} parent=31 // pred_check
          %p167 = pneg %p37
        $region34: #{tpu_custom_call.1} parent=31 // pred_check_branch
          %169 = sbr.rel (%p167) target = $region36
        $region35: #{tpu_custom_call.1} parent=31 // pred_region
          %170 = dma.done [#allocation5], 16
        $region36: #{tpu_custom_call.1} parent=31 // pred_fallthru
          _
        %s171 = sand.u32 %s71, 1
        %s172 = scalar_lea.sflag [#allocation3], %s171
        %s173 = sand.u32 %s71, 1
        %s174 = smul.addr %s173, 8
        %s175 = scalar_lea.vmem [#allocation6], %s174
        // Predicated region
        $region37: #{tpu_custom_call.1} parent=31 // pred_check
          %p176 = pneg %p84
        $region38: #{tpu_custom_call.1} parent=31 // pred_check_branch
          %178 = sbr.rel (%p176) target = $region40
        $region39: #{tpu_custom_call.1} parent=31 // pred_region
          %179 = dma.done %s172, 128
        $region40: #{tpu_custom_call.1} parent=31 // pred_fallthru
          _
        %180 = sfence
        %p181 = pneg %p37
        %p182 = pneg %p34
        %p183 = pneg %p58
        %p184 = pneg %p55
        %s185 = sand.u32 %s71, 1
        %s186 = scalar_lea.sflag [#allocation3], %s185
        %s187 = sand.u32 %s71, 1
        %s188 = smul.addr %s187, 8
        %s189 = scalar_lea.vmem [#allocation6], %s188
        %p190 = pneg %p84
        %p191 = pneg %p81
        %p192 = pneg %p110
        %p193 = pneg %p107
        %s194 = sand.u32 %s97, 1
        %s195 = scalar_lea.sflag [#allocation4], %s194
        %s196 = sand.u32 %s97, 1
        %s197 = smul.addr %s196, 8
        %s198 = scalar_lea.vmem [#allocation7], %s197
        %s199 = sld [smem:[#allocation2]]
        %s200 = sld [smem:[#allocation2 + $0x1]]
        %s201 = sld [smem:[#allocation2 + $0x2]]
        %s202 = sld [smem:[#allocation2 + $0x3]]
        %s203 = sld [smem:[#allocation2 + $0x4]]
        %s204 = sld [smem:[#allocation2 + $0x5]]
        %s205 = sld [smem:[#allocation2 + $0x6]]
        %s206 = sld [smem:[#allocation2 + $0x7]]
        %s207 = sld [smem:[#allocation2 + $0x8]]
        %s208 = sld [smem:[#allocation2 + $0x9]]
        %s209 = sld [smem:[#allocation2 + $0xa]]
        %s210 = sld [smem:[#allocation2 + $0xb]]
        %s211 = sld [smem:[#allocation2 + $0xc]]
        %s212 = sld [smem:[#allocation2 + $0xd]]
        %s213 = sld [smem:[#allocation2 + $0xe]]
        %s214 = sld [smem:[#allocation2 + $0xf]]
        %s215 = sld [smem:[#allocation2 + $0x10]]
        %s216 = sld [smem:[#allocation2 + $0x11]]
        %s217 = sld [smem:[#allocation2 + $0x12]]
        %s218 = sld [smem:[#allocation2 + $0x13]]
        %s219 = sld [smem:[#allocation2 + $0x14]]
        %s220 = sld [smem:[#allocation2 + $0x15]]
        %s221 = sld [smem:[#allocation2 + $0x16]]
        %s222 = sld [smem:[#allocation2 + $0x17]]
        %s223 = sld [smem:[#allocation2 + $0x18]]
        %s224 = sld [smem:[#allocation2 + $0x19]]
        %s225 = sld [smem:[#allocation2 + $0x1a]]
        %s226 = sld [smem:[#allocation2 + $0x1b]]
        %s227 = sld [smem:[#allocation2 + $0x1c]]
        %s228 = sld [smem:[#allocation2 + $0x1d]]
        %s229 = sld [smem:[#allocation2 + $0x1e]]
        %s230 = sld [smem:[#allocation2 + $0x1f]]
        %s231 = sld [smem:[#allocation2 + $0x20]]
        %s232 = sld [smem:[#allocation2 + $0x21]]
        %s233 = sld [smem:[#allocation2 + $0x22]]
        %s234 = sld [smem:[#allocation2 + $0x23]]
        %s235 = sld [smem:[#allocation2 + $0x24]]
        %s236 = sld [smem:[#allocation2 + $0x25]]
        %s237 = sld [smem:[#allocation2 + $0x26]]
        %s238 = sld [smem:[#allocation2 + $0x27]]
        %s239 = sld [smem:[#allocation2 + $0x28]]
        %s240 = sld [smem:[#allocation2 + $0x29]]
        %s241 = sld [smem:[#allocation2 + $0x2a]]
        %s242 = sld [smem:[#allocation2 + $0x2b]]
        %s243 = sld [smem:[#allocation2 + $0x2c]]
        %s244 = sld [smem:[#allocation2 + $0x2d]]
        %s245 = sld [smem:[#allocation2 + $0x2e]]
        %s246 = sld [smem:[#allocation2 + $0x2f]]
        %s247 = sld [smem:[#allocation2 + $0x30]]
        %s248 = sld [smem:[#allocation2 + $0x31]]
        %s249 = sld [smem:[#allocation2 + $0x32]]
        %s250 = sld [smem:[#allocation2 + $0x33]]
        %s251 = sld [smem:[#allocation2 + $0x34]]
        %s252 = sld [smem:[#allocation2 + $0x35]]
        %s253 = sld [smem:[#allocation2 + $0x36]]
        %s254 = sld [smem:[#allocation2 + $0x37]]
        %s255 = sld [smem:[#allocation2 + $0x38]]
        %s256 = sld [smem:[#allocation2 + $0x39]]
        %s257 = sld [smem:[#allocation2 + $0x3a]]
        %s258 = sld [smem:[#allocation2 + $0x3b]]
        %s259 = sld [smem:[#allocation2 + $0x3c]]
        %s260 = sld [smem:[#allocation2 + $0x3d]]
        %s261 = sld [smem:[#allocation2 + $0x3e]]
        %s262 = sld [smem:[#allocation2 + $0x3f]]
        %s263 = sld [smem:[#allocation2 + $0x40]]
        %s264 = sld [smem:[#allocation2 + $0x41]]
        %s265 = sld [smem:[#allocation2 + $0x42]]
        %s266 = sld [smem:[#allocation2 + $0x43]]
        %s267 = sld [smem:[#allocation2 + $0x44]]
        %s268 = sld [smem:[#allocation2 + $0x45]]
        %s269 = sld [smem:[#allocation2 + $0x46]]
        %s270 = sld [smem:[#allocation2 + $0x47]]
        %s271 = sld [smem:[#allocation2 + $0x48]]
        %s272 = sld [smem:[#allocation2 + $0x49]]
        %s273 = sld [smem:[#allocation2 + $0x4a]]
        %s274 = sld [smem:[#allocation2 + $0x4b]]
        %s275 = sld [smem:[#allocation2 + $0x4c]]
        %s276 = sld [smem:[#allocation2 + $0x4d]]
        %s277 = sld [smem:[#allocation2 + $0x4e]]
        %s278 = sld [smem:[#allocation2 + $0x4f]]
        %s279 = sld [smem:[#allocation2 + $0x50]]
        %s280 = sld [smem:[#allocation2 + $0x51]]
        %s281 = sld [smem:[#allocation2 + $0x52]]
        %s282 = sld [smem:[#allocation2 + $0x53]]
        %s283 = sld [smem:[#allocation2 + $0x54]]
        %s284 = sld [smem:[#allocation2 + $0x55]]
        %s285 = sld [smem:[#allocation2 + $0x56]]
        %s286 = sld [smem:[#allocation2 + $0x57]]
        %s287 = sld [smem:[#allocation2 + $0x58]]
        %s288 = sld [smem:[#allocation2 + $0x59]]
        %s289 = sld [smem:[#allocation2 + $0x5a]]
        %s290 = sld [smem:[#allocation2 + $0x5b]]
        %s291 = sld [smem:[#allocation2 + $0x5c]]
        %s292 = sld [smem:[#allocation2 + $0x5d]]
        %s293 = sld [smem:[#allocation2 + $0x5e]]
        %s294 = sld [smem:[#allocation2 + $0x5f]]
        %s295 = sld [smem:[#allocation2 + $0x60]]
        %s296 = sld [smem:[#allocation2 + $0x61]]
        %v297 = vld [vmem:[%s1] sm:$0x3]
        %v298 = vlaneseq
        %v299 = vand.u32 %v298, 127
        %v300 = vadd.s32 %v299, 128
        %v301 = vld [vmem:[%s175] sm:$0xff]
        %v303 = vcombine.high %v301, %v301
        %vm305 = vcmask 1043456
        %v306 = vsel %vm305, %v301, -inf
        %v307 = vrot.slane %v306, 4
        %v308 = vmax.f32 %v306, %v307
        %v309 = vrot.slane %v308, 2
        %v310 = vmax.f32 %v308, %v309
        %v311 = vrot.slane %v310, 1
        %v312 = vmax.f32 %v310, %v311
        %v313 = vsel %vm305, %v303, -inf
        %v314 = vrot.slane %v313, 4
        %v315 = vmax.f32 %v313, %v314
        %v316 = vrot.slane %v315, 2
        %v317 = vmax.f32 %v315, %v316
        %v318 = vrot.slane %v317, 1
        %v319 = vmax.f32 %v317, %v318
        %v320 = vsel %vm305, %v301, 0.0
        %v321 = vrot.slane %v320, 4
        %v322 = vadd.f32 %v320, %v321
        %v323 = vrot.slane %v322, 2
        %v324 = vadd.f32 %v322, %v323
        %v325 = vrot.slane %v324, 1
        %v326 = vadd.f32 %v324, %v325
        %v327 = vsel %vm305, %v303, 0.0
        %v328 = vrot.slane %v327, 4
        %v329 = vadd.f32 %v327, %v328
        %v330 = vrot.slane %v329, 2
        %v331 = vadd.f32 %v329, %v330
        %v332 = vrot.slane %v331, 1
        %v333 = vadd.f32 %v331, %v332
        %v334 = vmul.f32 %v326, 0.25
        %v335 = vmul.f32 %v333, 0.25
        %336 = vrot.lane.b32.xlu0 %v312, 3
        %v337 = vpop.permute.xlu0 %336
        %338 = vrot.lane.b32.xlu0 %v319, 3
        %v339 = vpop.permute.xlu0 %338
        %vm340 = vcmp.lt.s32.totalorder %v299, 3
        %v341 = vsel %vm340, %v337, %v339
        %v342 = vsel %vm340, %v339, %v337
        %vm343 = vcmp.ge.s32.totalorder %v297, 3
        %v346 = vcombine.low %v342, %v341
        %v348 = vunpack.c.l.s4 1966171168
        %v349 = vunpack.c.0.s8 %v348
        %v350 = vlaneseq
        %v351 = vshrl.u32 %v350, 7
        %v352 = vsub.s32 %v349, %v351
        %v353 = vrot.slane %v346, %v352
        %v355 = vunpack.c.l.s4 1966171168
        %v356 = vunpack.c.0.s8 %v355
        %v357 = vlaneseq
        %v358 = vshrl.u32 %v357, 7
        %v359 = vsub.s32 %v356, %v358
        %v360 = vrot.slane %v353, %v359
        %v362 = vsel %vm343, %v360, 0.0
        %363 = vrot.lane.b32.xlu0 %v312, 2
        %v364 = vpop.permute.xlu0 %363
        %365 = vrot.lane.b32.xlu0 %v319, 2
        %v366 = vpop.permute.xlu0 %365
        %vm367 = vcmp.lt.s32.totalorder %v299, 2
        %v368 = vsel %vm367, %v364, %v366
        %v369 = vsel %vm367, %v366, %v364
        %vm370 = vcmp.ge.s32.totalorder %v297, 2
        %v373 = vcombine.low %v369, %v368
        %v375 = vunpack.c.l.s4 1966171168
        %v376 = vunpack.c.0.s8 %v375
        %v377 = vlaneseq
        %v378 = vshrl.u32 %v377, 7
        %v379 = vsub.s32 %v376, %v378
        %v380 = vrot.slane %v373, %v379
        %v382 = vunpack.c.l.s4 1966171168
        %v383 = vunpack.c.0.s8 %v382
        %v384 = vlaneseq
        %v385 = vshrl.u32 %v384, 7
        %v386 = vsub.s32 %v383, %v385
        %v387 = vrot.slane %v380, %v386
        %v389 = vsel %vm370, %v387, 0.0
        %390 = vrot.lane.b32.xlu0 %v312, 1
        %v391 = vpop.permute.xlu0 %390
        %392 = vrot.lane.b32.xlu0 %v319, 1
        %v393 = vpop.permute.xlu0 %392
        %vm394 = vcmp.lt.s32.totalorder %v299, 1
        %v395 = vsel %vm394, %v391, %v393
        %v396 = vsel %vm394, %v393, %v391
        %vm397 = vcmp.ge.s32.totalorder %v297, 1
        %v400 = vcombine.low %v396, %v395
        %v402 = vunpack.c.l.s4 1966171168
        %v403 = vunpack.c.0.s8 %v402
        %v404 = vlaneseq
        %v405 = vshrl.u32 %v404, 7
        %v406 = vsub.s32 %v403, %v405
        %v407 = vrot.slane %v400, %v406
        %v409 = vunpack.c.l.s4 1966171168
        %v410 = vunpack.c.0.s8 %v409
        %v411 = vlaneseq
        %v412 = vshrl.u32 %v411, 7
        %v413 = vsub.s32 %v410, %v412
        %v414 = vrot.slane %v407, %v413
        %v416 = vsel %vm397, %v414, 0.0
        %417 = vrot.lane.b32.xlu0 %v312, 127
        %v418 = vpop.permute.xlu0 %417
        %419 = vrot.lane.b32.xlu0 %v319, 127
        %v420 = vpop.permute.xlu0 %419
        %vm421 = vcmp.lt.s32.totalorder %v299, 127
        %v422 = vsel %vm421, %v418, %v420
        %v423 = vsel %vm421, %v420, %v418
        %vm424 = vcmp.lt.s32.totalorder %v297, 15
        %v427 = vcombine.low %v422, %v423
        %v429 = vunpack.c.l.s4 1966171168
        %v430 = vunpack.c.0.s8 %v429
        %v431 = vlaneseq
        %v432 = vshrl.u32 %v431, 7
        %v433 = vsub.s32 %v430, %v432
        %v434 = vrot.slane %v427, %v433
        %v436 = vunpack.c.l.s4 1966171168
        %v437 = vunpack.c.0.s8 %v436
        %v438 = vlaneseq
        %v439 = vshrl.u32 %v438, 7
        %v440 = vsub.s32 %v437, %v439
        %v441 = vrot.slane %v434, %v440
        %v443 = vsel %vm424, %v441, 0.0
        %444 = vrot.lane.b32.xlu0 %v312, 126
        %v445 = vpop.permute.xlu0 %444
        %446 = vrot.lane.b32.xlu0 %v319, 126
        %v447 = vpop.permute.xlu0 %446
        %vm448 = vcmp.lt.s32.totalorder %v299, 126
        %v449 = vsel %vm448, %v445, %v447
        %v450 = vsel %vm448, %v447, %v445
        %vm451 = vcmp.lt.s32.totalorder %v297, 14
        %v454 = vcombine.low %v449, %v450
        %v456 = vunpack.c.l.s4 1966171168
        %v457 = vunpack.c.0.s8 %v456
        %v458 = vlaneseq
        %v459 = vshrl.u32 %v458, 7
        %v460 = vsub.s32 %v457, %v459
        %v461 = vrot.slane %v454, %v460
        %v463 = vunpack.c.l.s4 1966171168
        %v464 = vunpack.c.0.s8 %v463
        %v465 = vlaneseq
        %v466 = vshrl.u32 %v465, 7
        %v467 = vsub.s32 %v464, %v466
        %v468 = vrot.slane %v461, %v467
        %v470 = vsel %vm451, %v468, 0.0
        %471 = vrot.lane.b32.xlu0 %v312, 125
        %v472 = vpop.permute.xlu0 %471
        %473 = vrot.lane.b32.xlu0 %v319, 125
        %v474 = vpop.permute.xlu0 %473
        %vm475 = vcmp.lt.s32.totalorder %v299, 125
        %v476 = vsel %vm475, %v472, %v474
        %v477 = vsel %vm475, %v474, %v472
        %vm478 = vcmp.lt.s32.totalorder %v297, 13
        %v481 = vcombine.low %v476, %v477
        %v483 = vunpack.c.l.s4 1966171168
        %v484 = vunpack.c.0.s8 %v483
        %v485 = vlaneseq
        %v486 = vshrl.u32 %v485, 7
        %v487 = vsub.s32 %v484, %v486
        %v488 = vrot.slane %v481, %v487
        %v490 = vunpack.c.l.s4 1966171168
        %v491 = vunpack.c.0.s8 %v490
        %v492 = vlaneseq
        %v493 = vshrl.u32 %v492, 7
        %v494 = vsub.s32 %v491, %v493
        %v495 = vrot.slane %v488, %v494
        %v497 = vsel %vm478, %v495, 0.0
        %v498 = vstv %s199
        %v499 = vmul.f32 %v362, %v498
        %v500 = vstv %s200
        %v501 = vmul.f32 %v389, %v500
        %v502 = vadd.f32 %v499, %v501
        %v503 = vstv %s201
        %v504 = vmul.f32 %v416, %v503
        %v505 = vadd.f32 %v502, %v504
        %v506 = vstv %s202
        %v507 = vmul.f32 %v312, %v506
        %v508 = vmul.f32 %v319, %v506
        %v511 = vcombine.low %v507, %v508
        %v513 = vunpack.c.l.s4 1966171168
        %v514 = vunpack.c.0.s8 %v513
        %v515 = vlaneseq
        %v516 = vshrl.u32 %v515, 7
        %v517 = vsub.s32 %v514, %v516
        %v518 = vrot.slane %v511, %v517
        %v520 = vunpack.c.l.s4 1966171168
        %v521 = vunpack.c.0.s8 %v520
        %v522 = vlaneseq
        %v523 = vshrl.u32 %v522, 7
        %v524 = vsub.s32 %v521, %v523
        %v525 = vrot.slane %v518, %v524
        %v527 = vadd.f32 %v505, %v525
        %v528 = vstv %s203
        %v529 = vmul.f32 %v443, %v528
        %v530 = vadd.f32 %v527, %v529
        %v531 = vstv %s204
        %v532 = vmul.f32 %v470, %v531
        %v533 = vadd.f32 %v530, %v532
        %v534 = vstv %s205
        %v535 = vmul.f32 %v497, %v534
        %v536 = vadd.f32 %v533, %v535
        %v538 = vlaneseq
        %v539 = vshrl.u32 %v538, 7
        %v540 = vsub.s32 0, %v539
        %v541 = vrot.slane %v536, %v540
        %v542 = vlaneseq
        %v543 = vshrl.u32 %v542, 7
        %v544 = vsub.s32 1, %v543
        %v545 = vrot.slane %v536, %v544
        %548 = vrot.lane.b32.xlu0 %v541, 48
        %v549 = vpop.permute.xlu0 %548
        %550 = vrot.lane.b32.xlu0 %v545, 48
        %v551 = vpop.permute.xlu0 %550
        %vm552 = vcmp.lt.s32.totalorder %v299, 48
        %v553 = vsel %vm552, %v549, %v551
        %v554 = vsel %vm552, %v551, %v549
        %vm555 = vcmp.ge.s32.totalorder %v299, 48
        %vm556 = vcmp.ge.s32.totalorder %v300, 48
        %v557 = vsel %vm555, %v554, 0.0
        %v558 = vsel %vm556, %v553, 0.0
        %v559 = vstv %s206
        %v560 = vmul.f32 %v362, %v559
        %v561 = vstv %s207
        %v562 = vmul.f32 %v389, %v561
        %v563 = vadd.f32 %v560, %v562
        %v564 = vstv %s208
        %v565 = vmul.f32 %v416, %v564
        %v566 = vadd.f32 %v563, %v565
        %v567 = vstv %s209
        %v568 = vmul.f32 %v312, %v567
        %v569 = vmul.f32 %v319, %v567
        %v572 = vcombine.low %v568, %v569
        %v574 = vunpack.c.l.s4 1966171168
        %v575 = vunpack.c.0.s8 %v574
        %v576 = vlaneseq
        %v577 = vshrl.u32 %v576, 7
        %v578 = vsub.s32 %v575, %v577
        %v579 = vrot.slane %v572, %v578
        %v581 = vunpack.c.l.s4 1966171168
        %v582 = vunpack.c.0.s8 %v581
        %v583 = vlaneseq
        %v584 = vshrl.u32 %v583, 7
        %v585 = vsub.s32 %v582, %v584
        %v586 = vrot.slane %v579, %v585
        %v588 = vadd.f32 %v566, %v586
        %v589 = vstv %s210
        %v590 = vmul.f32 %v443, %v589
        %v591 = vadd.f32 %v588, %v590
        %v592 = vstv %s211
        %v593 = vmul.f32 %v470, %v592
        %v594 = vadd.f32 %v591, %v593
        %v595 = vstv %s212
        %v596 = vmul.f32 %v497, %v595
        %v597 = vadd.f32 %v594, %v596
        %v599 = vlaneseq
        %v600 = vshrl.u32 %v599, 7
        %v601 = vsub.s32 0, %v600
        %v602 = vrot.slane %v597, %v601
        %v603 = vlaneseq
        %v604 = vshrl.u32 %v603, 7
        %v605 = vsub.s32 1, %v604
        %v606 = vrot.slane %v597, %v605
        %609 = vrot.lane.b32.xlu0 %v602, 32
        %v610 = vpop.permute.xlu0 %609
        %611 = vrot.lane.b32.xlu0 %v606, 32
        %v612 = vpop.permute.xlu0 %611
        %vm613 = vcmp.lt.s32.totalorder %v299, 32
        %v614 = vsel %vm613, %v610, %v612
        %v615 = vsel %vm613, %v612, %v610
        %vm616 = vcmp.ge.s32.totalorder %v299, 32
        %vm617 = vcmp.ge.s32.totalorder %v300, 32
        %v618 = vsel %vm616, %v615, 0.0
        %v619 = vsel %vm617, %v614, 0.0
        %v620 = vadd.f32 %v557, %v618
        %v621 = vadd.f32 %v558, %v619
        %v622 = vstv %s213
        %v623 = vmul.f32 %v362, %v622
        %v624 = vstv %s214
        %v625 = vmul.f32 %v389, %v624
        %v626 = vadd.f32 %v623, %v625
        %v627 = vstv %s215
        %v628 = vmul.f32 %v416, %v627
        %v629 = vadd.f32 %v626, %v628
        %v630 = vstv %s216
        %v631 = vmul.f32 %v312, %v630
        %v632 = vmul.f32 %v319, %v630
        %v635 = vcombine.low %v631, %v632
        %v637 = vunpack.c.l.s4 1966171168
        %v638 = vunpack.c.0.s8 %v637
        %v639 = vlaneseq
        %v640 = vshrl.u32 %v639, 7
        %v641 = vsub.s32 %v638, %v640
        %v642 = vrot.slane %v635, %v641
        %v644 = vunpack.c.l.s4 1966171168
        %v645 = vunpack.c.0.s8 %v644
        %v646 = vlaneseq
        %v647 = vshrl.u32 %v646, 7
        %v648 = vsub.s32 %v645, %v647
        %v649 = vrot.slane %v642, %v648
        %v651 = vadd.f32 %v629, %v649
        %v652 = vstv %s217
        %v653 = vmul.f32 %v443, %v652
        %v654 = vadd.f32 %v651, %v653
        %v655 = vstv %s218
        %v656 = vmul.f32 %v470, %v655
        %v657 = vadd.f32 %v654, %v656
        %v658 = vstv %s219
        %v659 = vmul.f32 %v497, %v658
        %v660 = vadd.f32 %v657, %v659
        %v662 = vlaneseq
        %v663 = vshrl.u32 %v662, 7
        %v664 = vsub.s32 0, %v663
        %v665 = vrot.slane %v660, %v664
        %v666 = vlaneseq
        %v667 = vshrl.u32 %v666, 7
        %v668 = vsub.s32 1, %v667
        %v669 = vrot.slane %v660, %v668
        %672 = vrot.lane.b32.xlu0 %v665, 16
        %v673 = vpop.permute.xlu0 %672
        %674 = vrot.lane.b32.xlu0 %v669, 16
        %v675 = vpop.permute.xlu0 %674
        %vm676 = vcmp.lt.s32.totalorder %v299, 16
        %v677 = vsel %vm676, %v673, %v675
        %v678 = vsel %vm676, %v675, %v673
        %vm679 = vcmp.ge.s32.totalorder %v299, 16
        %vm680 = vcmp.ge.s32.totalorder %v300, 16
        %v681 = vsel %vm679, %v678, 0.0
        %v682 = vsel %vm680, %v677, 0.0
        %v683 = vadd.f32 %v620, %v681
        %v684 = vadd.f32 %v621, %v682
        %v685 = vstv %s220
        %v686 = vmul.f32 %v362, %v685
        %v687 = vstv %s221
        %v688 = vmul.f32 %v389, %v687
        %v689 = vadd.f32 %v686, %v688
        %v690 = vstv %s222
        %v691 = vmul.f32 %v416, %v690
        %v692 = vadd.f32 %v689, %v691
        %v693 = vstv %s223
        %v694 = vmul.f32 %v312, %v693
        %v695 = vmul.f32 %v319, %v693
        %v698 = vcombine.low %v694, %v695
        %v700 = vunpack.c.l.s4 1966171168
        %v701 = vunpack.c.0.s8 %v700
        %v702 = vlaneseq
        %v703 = vshrl.u32 %v702, 7
        %v704 = vsub.s32 %v701, %v703
        %v705 = vrot.slane %v698, %v704
        %v707 = vunpack.c.l.s4 1966171168
        %v708 = vunpack.c.0.s8 %v707
        %v709 = vlaneseq
        %v710 = vshrl.u32 %v709, 7
        %v711 = vsub.s32 %v708, %v710
        %v712 = vrot.slane %v705, %v711
        %v714 = vadd.f32 %v692, %v712
        %v715 = vstv %s224
        %v716 = vmul.f32 %v443, %v715
        %v717 = vadd.f32 %v714, %v716
        %v718 = vstv %s225
        %v719 = vmul.f32 %v470, %v718
        %v720 = vadd.f32 %v717, %v719
        %v721 = vstv %s226
        %v722 = vmul.f32 %v497, %v721
        %v723 = vadd.f32 %v720, %v722
        %v725 = vlaneseq
        %v726 = vshrl.u32 %v725, 7
        %v727 = vsub.s32 0, %v726
        %v728 = vrot.slane %v723, %v727
        %v729 = vlaneseq
        %v730 = vshrl.u32 %v729, 7
        %v731 = vsub.s32 1, %v730
        %v732 = vrot.slane %v723, %v731
        %v735 = vadd.f32 %v683, %v728
        %v736 = vadd.f32 %v684, %v732
        %v737 = vstv %s227
        %v738 = vmul.f32 %v362, %v737
        %v739 = vstv %s228
        %v740 = vmul.f32 %v389, %v739
        %v741 = vadd.f32 %v738, %v740
        %v742 = vstv %s229
        %v743 = vmul.f32 %v416, %v742
        %v744 = vadd.f32 %v741, %v743
        %v745 = vstv %s230
        %v746 = vmul.f32 %v312, %v745
        %v747 = vmul.f32 %v319, %v745
        %v750 = vcombine.low %v746, %v747
        %v752 = vunpack.c.l.s4 1966171168
        %v753 = vunpack.c.0.s8 %v752
        %v754 = vlaneseq
        %v755 = vshrl.u32 %v754, 7
        %v756 = vsub.s32 %v753, %v755
        %v757 = vrot.slane %v750, %v756
        %v759 = vunpack.c.l.s4 1966171168
        %v760 = vunpack.c.0.s8 %v759
        %v761 = vlaneseq
        %v762 = vshrl.u32 %v761, 7
        %v763 = vsub.s32 %v760, %v762
        %v764 = vrot.slane %v757, %v763
        %v766 = vadd.f32 %v744, %v764
        %v767 = vstv %s231
        %v768 = vmul.f32 %v443, %v767
        %v769 = vadd.f32 %v766, %v768
        %v770 = vstv %s232
        %v771 = vmul.f32 %v470, %v770
        %v772 = vadd.f32 %v769, %v771
        %v773 = vstv %s233
        %v774 = vmul.f32 %v497, %v773
        %v775 = vadd.f32 %v772, %v774
        %v777 = vlaneseq
        %v778 = vshrl.u32 %v777, 7
        %v779 = vsub.s32 0, %v778
        %v780 = vrot.slane %v775, %v779
        %v781 = vlaneseq
        %v782 = vshrl.u32 %v781, 7
        %v783 = vsub.s32 1, %v782
        %v784 = vrot.slane %v775, %v783
        %787 = vrot.lane.b32.xlu0 %v780, 112
        %v788 = vpop.permute.xlu0 %787
        %789 = vrot.lane.b32.xlu0 %v784, 112
        %v790 = vpop.permute.xlu0 %789
        %vm791 = vcmp.lt.s32.totalorder %v299, 112
        %v792 = vsel %vm791, %v788, %v790
        %v793 = vsel %vm791, %v790, %v788
        %vm794 = vcmp.lt.s32.totalorder %v299, 240
        %vm795 = vcmp.lt.s32.totalorder %v300, 240
        %v796 = vsel %vm794, %v792, 0.0
        %v797 = vsel %vm795, %v793, 0.0
        %v798 = vadd.f32 %v735, %v796
        %v799 = vadd.f32 %v736, %v797
        %v800 = vstv %s234
        %v801 = vmul.f32 %v362, %v800
        %v802 = vstv %s235
        %v803 = vmul.f32 %v389, %v802
        %v804 = vadd.f32 %v801, %v803
        %v805 = vstv %s236
        %v806 = vmul.f32 %v416, %v805
        %v807 = vadd.f32 %v804, %v806
        %v808 = vstv %s237
        %v809 = vmul.f32 %v312, %v808
        %v810 = vmul.f32 %v319, %v808
        %v813 = vcombine.low %v809, %v810
        %v815 = vunpack.c.l.s4 1966171168
        %v816 = vunpack.c.0.s8 %v815
        %v817 = vlaneseq
        %v818 = vshrl.u32 %v817, 7
        %v819 = vsub.s32 %v816, %v818
        %v820 = vrot.slane %v813, %v819
        %v822 = vunpack.c.l.s4 1966171168
        %v823 = vunpack.c.0.s8 %v822
        %v824 = vlaneseq
        %v825 = vshrl.u32 %v824, 7
        %v826 = vsub.s32 %v823, %v825
        %v827 = vrot.slane %v820, %v826
        %v829 = vadd.f32 %v807, %v827
        %v830 = vstv %s238
        %v831 = vmul.f32 %v443, %v830
        %v832 = vadd.f32 %v829, %v831
        %v833 = vstv %s239
        %v834 = vmul.f32 %v470, %v833
        %v835 = vadd.f32 %v832, %v834
        %v836 = vstv %s240
        %v837 = vmul.f32 %v497, %v836
        %v838 = vadd.f32 %v835, %v837
        %v840 = vlaneseq
        %v841 = vshrl.u32 %v840, 7
        %v842 = vsub.s32 0, %v841
        %v843 = vrot.slane %v838, %v842
        %v844 = vlaneseq
        %v845 = vshrl.u32 %v844, 7
        %v846 = vsub.s32 1, %v845
        %v847 = vrot.slane %v838, %v846
        %850 = vrot.lane.b32.xlu0 %v843, 96
        %v851 = vpop.permute.xlu0 %850
        %852 = vrot.lane.b32.xlu0 %v847, 96
        %v853 = vpop.permute.xlu0 %852
        %vm854 = vcmp.lt.s32.totalorder %v299, 96
        %v855 = vsel %vm854, %v851, %v853
        %v856 = vsel %vm854, %v853, %v851
        %vm857 = vcmp.lt.s32.totalorder %v299, 224
        %vm858 = vcmp.lt.s32.totalorder %v300, 224
        %v859 = vsel %vm857, %v855, 0.0
        %v860 = vsel %vm858, %v856, 0.0
        %v861 = vadd.f32 %v798, %v859
        %v862 = vadd.f32 %v799, %v860
        %v863 = vstv %s241
        %v864 = vmul.f32 %v362, %v863
        %v865 = vstv %s242
        %v866 = vmul.f32 %v389, %v865
        %v867 = vadd.f32 %v864, %v866
        %v868 = vstv %s243
        %v869 = vmul.f32 %v416, %v868
        %v870 = vadd.f32 %v867, %v869
        %v871 = vstv %s244
        %v872 = vmul.f32 %v312, %v871
        %v873 = vmul.f32 %v319, %v871
        %v876 = vcombine.low %v872, %v873
        %v878 = vunpack.c.l.s4 1966171168
        %v879 = vunpack.c.0.s8 %v878
        %v880 = vlaneseq
        %v881 = vshrl.u32 %v880, 7
        %v882 = vsub.s32 %v879, %v881
        %v883 = vrot.slane %v876, %v882
        %v885 = vunpack.c.l.s4 1966171168
        %v886 = vunpack.c.0.s8 %v885
        %v887 = vlaneseq
        %v888 = vshrl.u32 %v887, 7
        %v889 = vsub.s32 %v886, %v888
        %v890 = vrot.slane %v883, %v889
        %v892 = vadd.f32 %v870, %v890
        %v893 = vstv %s245
        %v894 = vmul.f32 %v443, %v893
        %v895 = vadd.f32 %v892, %v894
        %v896 = vstv %s246
        %v897 = vmul.f32 %v470, %v896
        %v898 = vadd.f32 %v895, %v897
        %v899 = vstv %s247
        %v900 = vmul.f32 %v497, %v899
        %v901 = vadd.f32 %v898, %v900
        %v903 = vlaneseq
        %v904 = vshrl.u32 %v903, 7
        %v905 = vsub.s32 0, %v904
        %v906 = vrot.slane %v901, %v905
        %v907 = vlaneseq
        %v908 = vshrl.u32 %v907, 7
        %v909 = vsub.s32 1, %v908
        %v910 = vrot.slane %v901, %v909
        %913 = vrot.lane.b32.xlu0 %v906, 80
        %v914 = vpop.permute.xlu0 %913
        %915 = vrot.lane.b32.xlu0 %v910, 80
        %v916 = vpop.permute.xlu0 %915
        %vm917 = vcmp.lt.s32.totalorder %v299, 80
        %v918 = vsel %vm917, %v914, %v916
        %v919 = vsel %vm917, %v916, %v914
        %vm920 = vcmp.lt.s32.totalorder %v299, 208
        %vm921 = vcmp.lt.s32.totalorder %v300, 208
        %v922 = vsel %vm920, %v918, 0.0
        %v923 = vsel %vm921, %v919, 0.0
        %v924 = vadd.f32 %v861, %v922
        %v925 = vadd.f32 %v862, %v923
        %926 = vrot.lane.b32.xlu0 %v334, 3
        %v927 = vpop.permute.xlu0 %926
        %928 = vrot.lane.b32.xlu0 %v335, 3
        %v929 = vpop.permute.xlu0 %928
        %v930 = vsel %vm340, %v927, %v929
        %v931 = vsel %vm340, %v929, %v927
        %v934 = vcombine.low %v931, %v930
        %v936 = vunpack.c.l.s4 1966171168
        %v937 = vunpack.c.0.s8 %v936
        %v938 = vlaneseq
        %v939 = vshrl.u32 %v938, 7
        %v940 = vsub.s32 %v937, %v939
        %v941 = vrot.slane %v934, %v940
        %v943 = vunpack.c.l.s4 1966171168
        %v944 = vunpack.c.0.s8 %v943
        %v945 = vlaneseq
        %v946 = vshrl.u32 %v945, 7
        %v947 = vsub.s32 %v944, %v946
        %v948 = vrot.slane %v941, %v947
        %v950 = vsel %vm343, %v948, 0.0
        %951 = vrot.lane.b32.xlu0 %v334, 2
        %v952 = vpop.permute.xlu0 %951
        %953 = vrot.lane.b32.xlu0 %v335, 2
        %v954 = vpop.permute.xlu0 %953
        %v955 = vsel %vm367, %v952, %v954
        %v956 = vsel %vm367, %v954, %v952
        %v959 = vcombine.low %v956, %v955
        %v961 = vunpack.c.l.s4 1966171168
        %v962 = vunpack.c.0.s8 %v961
        %v963 = vlaneseq
        %v964 = vshrl.u32 %v963, 7
        %v965 = vsub.s32 %v962, %v964
        %v966 = vrot.slane %v959, %v965
        %v968 = vunpack.c.l.s4 1966171168
        %v969 = vunpack.c.0.s8 %v968
        %v970 = vlaneseq
        %v971 = vshrl.u32 %v970, 7
        %v972 = vsub.s32 %v969, %v971
        %v973 = vrot.slane %v966, %v972
        %v975 = vsel %vm370, %v973, 0.0
        %976 = vrot.lane.b32.xlu0 %v334, 1
        %v977 = vpop.permute.xlu0 %976
        %978 = vrot.lane.b32.xlu0 %v335, 1
        %v979 = vpop.permute.xlu0 %978
        %v980 = vsel %vm394, %v977, %v979
        %v981 = vsel %vm394, %v979, %v977
        %v984 = vcombine.low %v981, %v980
        %v986 = vunpack.c.l.s4 1966171168
        %v987 = vunpack.c.0.s8 %v986
        %v988 = vlaneseq
        %v989 = vshrl.u32 %v988, 7
        %v990 = vsub.s32 %v987, %v989
        %v991 = vrot.slane %v984, %v990
        %v993 = vunpack.c.l.s4 1966171168
        %v994 = vunpack.c.0.s8 %v993
        %v995 = vlaneseq
        %v996 = vshrl.u32 %v995, 7
        %v997 = vsub.s32 %v994, %v996
        %v998 = vrot.slane %v991, %v997
        %v1000 = vsel %vm397, %v998, 0.0
        %1001 = vrot.lane.b32.xlu0 %v334, 127
        %v1002 = vpop.permute.xlu0 %1001
        %1003 = vrot.lane.b32.xlu0 %v335, 127
        %v1004 = vpop.permute.xlu0 %1003
        %v1005 = vsel %vm421, %v1002, %v1004
        %v1006 = vsel %vm421, %v1004, %v1002
        %v1009 = vcombine.low %v1005, %v1006
        %v1011 = vunpack.c.l.s4 1966171168
        %v1012 = vunpack.c.0.s8 %v1011
        %v1013 = vlaneseq
        %v1014 = vshrl.u32 %v1013, 7
        %v1015 = vsub.s32 %v1012, %v1014
        %v1016 = vrot.slane %v1009, %v1015
        %v1018 = vunpack.c.l.s4 1966171168
        %v1019 = vunpack.c.0.s8 %v1018
        %v1020 = vlaneseq
        %v1021 = vshrl.u32 %v1020, 7
        %v1022 = vsub.s32 %v1019, %v1021
        %v1023 = vrot.slane %v1016, %v1022
        %v1025 = vsel %vm424, %v1023, 0.0
        %1026 = vrot.lane.b32.xlu0 %v334, 126
        %v1027 = vpop.permute.xlu0 %1026
        %1028 = vrot.lane.b32.xlu0 %v335, 126
        %v1029 = vpop.permute.xlu0 %1028
        %v1030 = vsel %vm448, %v1027, %v1029
        %v1031 = vsel %vm448, %v1029, %v1027
        %v1034 = vcombine.low %v1030, %v1031
        %v1036 = vunpack.c.l.s4 1966171168
        %v1037 = vunpack.c.0.s8 %v1036
        %v1038 = vlaneseq
        %v1039 = vshrl.u32 %v1038, 7
        %v1040 = vsub.s32 %v1037, %v1039
        %v1041 = vrot.slane %v1034, %v1040
        %v1043 = vunpack.c.l.s4 1966171168
        %v1044 = vunpack.c.0.s8 %v1043
        %v1045 = vlaneseq
        %v1046 = vshrl.u32 %v1045, 7
        %v1047 = vsub.s32 %v1044, %v1046
        %v1048 = vrot.slane %v1041, %v1047
        %v1050 = vsel %vm451, %v1048, 0.0
        %1051 = vrot.lane.b32.xlu0 %v334, 125
        %v1052 = vpop.permute.xlu0 %1051
        %1053 = vrot.lane.b32.xlu0 %v335, 125
        %v1054 = vpop.permute.xlu0 %1053
        %v1055 = vsel %vm475, %v1052, %v1054
        %v1056 = vsel %vm475, %v1054, %v1052
        %v1059 = vcombine.low %v1055, %v1056
        %v1061 = vunpack.c.l.s4 1966171168
        %v1062 = vunpack.c.0.s8 %v1061
        %v1063 = vlaneseq
        %v1064 = vshrl.u32 %v1063, 7
        %v1065 = vsub.s32 %v1062, %v1064
        %v1066 = vrot.slane %v1059, %v1065
        %v1068 = vunpack.c.l.s4 1966171168
        %v1069 = vunpack.c.0.s8 %v1068
        %v1070 = vlaneseq
        %v1071 = vshrl.u32 %v1070, 7
        %v1072 = vsub.s32 %v1069, %v1071
        %v1073 = vrot.slane %v1066, %v1072
        %v1075 = vsel %vm478, %v1073, 0.0
        %v1076 = vstv %s248
        %v1077 = vmul.f32 %v950, %v1076
        %v1078 = vstv %s249
        %v1079 = vmul.f32 %v975, %v1078
        %v1080 = vadd.f32 %v1077, %v1079
        %v1081 = vstv %s250
        %v1082 = vmul.f32 %v1000, %v1081
        %v1083 = vadd.f32 %v1080, %v1082
        %v1084 = vstv %s251
        %v1085 = vmul.f32 %v334, %v1084
        %v1086 = vmul.f32 %v335, %v1084
        %v1089 = vcombine.low %v1085, %v1086
        %v1091 = vunpack.c.l.s4 1966171168
        %v1092 = vunpack.c.0.s8 %v1091
        %v1093 = vlaneseq
        %v1094 = vshrl.u32 %v1093, 7
        %v1095 = vsub.s32 %v1092, %v1094
        %v1096 = vrot.slane %v1089, %v1095
        %v1098 = vunpack.c.l.s4 1966171168
        %v1099 = vunpack.c.0.s8 %v1098
        %v1100 = vlaneseq
        %v1101 = vshrl.u32 %v1100, 7
        %v1102 = vsub.s32 %v1099, %v1101
        %v1103 = vrot.slane %v1096, %v1102
        %v1105 = vadd.f32 %v1083, %v1103
        %v1106 = vstv %s252
        %v1107 = vmul.f32 %v1025, %v1106
        %v1108 = vadd.f32 %v1105, %v1107
        %v1109 = vstv %s253
        %v1110 = vmul.f32 %v1050, %v1109
        %v1111 = vadd.f32 %v1108, %v1110
        %v1112 = vstv %s254
        %v1113 = vmul.f32 %v1075, %v1112
        %v1114 = vadd.f32 %v1111, %v1113
        %v1116 = vlaneseq
        %v1117 = vshrl.u32 %v1116, 7
        %v1118 = vsub.s32 0, %v1117
        %v1119 = vrot.slane %v1114, %v1118
        %v1120 = vlaneseq
        %v1121 = vshrl.u32 %v1120, 7
        %v1122 = vsub.s32 1, %v1121
        %v1123 = vrot.slane %v1114, %v1122
        %1126 = vrot.lane.b32.xlu0 %v1119, 48
        %v1127 = vpop.permute.xlu0 %1126
        %1128 = vrot.lane.b32.xlu0 %v1123, 48
        %v1129 = vpop.permute.xlu0 %1128
        %v1130 = vsel %vm552, %v1127, %v1129
        %v1131 = vsel %vm552, %v1129, %v1127
        %v1132 = vsel %vm555, %v1131, 0.0
        %v1133 = vsel %vm556, %v1130, 0.0
        %v1134 = vadd.f32 %v924, %v1132
        %v1135 = vadd.f32 %v925, %v1133
        %v1136 = vstv %s255
        %v1137 = vmul.f32 %v950, %v1136
        %v1138 = vstv %s256
        %v1139 = vmul.f32 %v975, %v1138
        %v1140 = vadd.f32 %v1137, %v1139
        %v1141 = vstv %s257
        %v1142 = vmul.f32 %v1000, %v1141
        %v1143 = vadd.f32 %v1140, %v1142
        %v1144 = vstv %s258
        %v1145 = vmul.f32 %v334, %v1144
        %v1146 = vmul.f32 %v335, %v1144
        %v1149 = vcombine.low %v1145, %v1146
        %v1151 = vunpack.c.l.s4 1966171168
        %v1152 = vunpack.c.0.s8 %v1151
        %v1153 = vlaneseq
        %v1154 = vshrl.u32 %v1153, 7
        %v1155 = vsub.s32 %v1152, %v1154
        %v1156 = vrot.slane %v1149, %v1155
        %v1158 = vunpack.c.l.s4 1966171168
        %v1159 = vunpack.c.0.s8 %v1158
        %v1160 = vlaneseq
        %v1161 = vshrl.u32 %v1160, 7
        %v1162 = vsub.s32 %v1159, %v1161
        %v1163 = vrot.slane %v1156, %v1162
        %v1165 = vadd.f32 %v1143, %v1163
        %v1166 = vstv %s259
        %v1167 = vmul.f32 %v1025, %v1166
        %v1168 = vadd.f32 %v1165, %v1167
        %v1169 = vstv %s260
        %v1170 = vmul.f32 %v1050, %v1169
        %v1171 = vadd.f32 %v1168, %v1170
        %v1172 = vstv %s261
        %v1173 = vmul.f32 %v1075, %v1172
        %v1174 = vadd.f32 %v1171, %v1173
        %v1176 = vlaneseq
        %v1177 = vshrl.u32 %v1176, 7
        %v1178 = vsub.s32 0, %v1177
        %v1179 = vrot.slane %v1174, %v1178
        %v1180 = vlaneseq
        %v1181 = vshrl.u32 %v1180, 7
        %v1182 = vsub.s32 1, %v1181
        %v1183 = vrot.slane %v1174, %v1182
        %1186 = vrot.lane.b32.xlu0 %v1179, 32
        %v1187 = vpop.permute.xlu0 %1186
        %1188 = vrot.lane.b32.xlu0 %v1183, 32
        %v1189 = vpop.permute.xlu0 %1188
        %v1190 = vsel %vm613, %v1187, %v1189
        %v1191 = vsel %vm613, %v1189, %v1187
        %v1192 = vsel %vm616, %v1191, 0.0
        %v1193 = vsel %vm617, %v1190, 0.0
        %v1194 = vadd.f32 %v1134, %v1192
        %v1195 = vadd.f32 %v1135, %v1193
        %v1196 = vstv %s262
        %v1197 = vmul.f32 %v950, %v1196
        %v1198 = vstv %s263
        %v1199 = vmul.f32 %v975, %v1198
        %v1200 = vadd.f32 %v1197, %v1199
        %v1201 = vstv %s264
        %v1202 = vmul.f32 %v1000, %v1201
        %v1203 = vadd.f32 %v1200, %v1202
        %v1204 = vstv %s265
        %v1205 = vmul.f32 %v334, %v1204
        %v1206 = vmul.f32 %v335, %v1204
        %v1209 = vcombine.low %v1205, %v1206
        %v1211 = vunpack.c.l.s4 1966171168
        %v1212 = vunpack.c.0.s8 %v1211
        %v1213 = vlaneseq
        %v1214 = vshrl.u32 %v1213, 7
        %v1215 = vsub.s32 %v1212, %v1214
        %v1216 = vrot.slane %v1209, %v1215
        %v1218 = vunpack.c.l.s4 1966171168
        %v1219 = vunpack.c.0.s8 %v1218
        %v1220 = vlaneseq
        %v1221 = vshrl.u32 %v1220, 7
        %v1222 = vsub.s32 %v1219, %v1221
        %v1223 = vrot.slane %v1216, %v1222
        %v1225 = vadd.f32 %v1203, %v1223
        %v1226 = vstv %s266
        %v1227 = vmul.f32 %v1025, %v1226
        %v1228 = vadd.f32 %v1225, %v1227
        %v1229 = vstv %s267
        %v1230 = vmul.f32 %v1050, %v1229
        %v1231 = vadd.f32 %v1228, %v1230
        %v1232 = vstv %s268
        %v1233 = vmul.f32 %v1075, %v1232
        %v1234 = vadd.f32 %v1231, %v1233
        %v1236 = vlaneseq
        %v1237 = vshrl.u32 %v1236, 7
        %v1238 = vsub.s32 0, %v1237
        %v1239 = vrot.slane %v1234, %v1238
        %v1240 = vlaneseq
        %v1241 = vshrl.u32 %v1240, 7
        %v1242 = vsub.s32 1, %v1241
        %v1243 = vrot.slane %v1234, %v1242
        %1246 = vrot.lane.b32.xlu0 %v1239, 16
        %v1247 = vpop.permute.xlu0 %1246
        %1248 = vrot.lane.b32.xlu0 %v1243, 16
        %v1249 = vpop.permute.xlu0 %1248
        %v1250 = vsel %vm676, %v1247, %v1249
        %v1251 = vsel %vm676, %v1249, %v1247
        %v1252 = vsel %vm679, %v1251, 0.0
        %v1253 = vsel %vm680, %v1250, 0.0
        %v1254 = vadd.f32 %v1194, %v1252
        %v1255 = vadd.f32 %v1195, %v1253
        %v1256 = vstv %s269
        %v1257 = vmul.f32 %v950, %v1256
        %v1258 = vstv %s270
        %v1259 = vmul.f32 %v975, %v1258
        %v1260 = vadd.f32 %v1257, %v1259
        %v1261 = vstv %s271
        %v1262 = vmul.f32 %v1000, %v1261
        %v1263 = vadd.f32 %v1260, %v1262
        %v1264 = vstv %s272
        %v1265 = vmul.f32 %v334, %v1264
        %v1266 = vmul.f32 %v335, %v1264
        %v1269 = vcombine.low %v1265, %v1266
        %v1271 = vunpack.c.l.s4 1966171168
        %v1272 = vunpack.c.0.s8 %v1271
        %v1273 = vlaneseq
        %v1274 = vshrl.u32 %v1273, 7
        %v1275 = vsub.s32 %v1272, %v1274
        %v1276 = vrot.slane %v1269, %v1275
        %v1278 = vunpack.c.l.s4 1966171168
        %v1279 = vunpack.c.0.s8 %v1278
        %v1280 = vlaneseq
        %v1281 = vshrl.u32 %v1280, 7
        %v1282 = vsub.s32 %v1279, %v1281
        %v1283 = vrot.slane %v1276, %v1282
        %v1285 = vadd.f32 %v1263, %v1283
        %v1286 = vstv %s273
        %v1287 = vmul.f32 %v1025, %v1286
        %v1288 = vadd.f32 %v1285, %v1287
        %v1289 = vstv %s274
        %v1290 = vmul.f32 %v1050, %v1289
        %v1291 = vadd.f32 %v1288, %v1290
        %v1292 = vstv %s275
        %v1293 = vmul.f32 %v1075, %v1292
        %v1294 = vadd.f32 %v1291, %v1293
        %v1296 = vlaneseq
        %v1297 = vshrl.u32 %v1296, 7
        %v1298 = vsub.s32 0, %v1297
        %v1299 = vrot.slane %v1294, %v1298
        %v1300 = vlaneseq
        %v1301 = vshrl.u32 %v1300, 7
        %v1302 = vsub.s32 1, %v1301
        %v1303 = vrot.slane %v1294, %v1302
        %v1306 = vadd.f32 %v1254, %v1299
        %v1307 = vadd.f32 %v1255, %v1303
        %v1308 = vstv %s276
        %v1309 = vmul.f32 %v950, %v1308
        %v1310 = vstv %s277
        %v1311 = vmul.f32 %v975, %v1310
        %v1312 = vadd.f32 %v1309, %v1311
        %v1313 = vstv %s278
        %v1314 = vmul.f32 %v1000, %v1313
        %v1315 = vadd.f32 %v1312, %v1314
        %v1316 = vstv %s279
        %v1317 = vmul.f32 %v334, %v1316
        %v1318 = vmul.f32 %v335, %v1316
        %v1321 = vcombine.low %v1317, %v1318
        %v1323 = vunpack.c.l.s4 1966171168
        %v1324 = vunpack.c.0.s8 %v1323
        %v1325 = vlaneseq
        %v1326 = vshrl.u32 %v1325, 7
        %v1327 = vsub.s32 %v1324, %v1326
        %v1328 = vrot.slane %v1321, %v1327
        %v1330 = vunpack.c.l.s4 1966171168
        %v1331 = vunpack.c.0.s8 %v1330
        %v1332 = vlaneseq
        %v1333 = vshrl.u32 %v1332, 7
        %v1334 = vsub.s32 %v1331, %v1333
        %v1335 = vrot.slane %v1328, %v1334
        %v1337 = vadd.f32 %v1315, %v1335
        %v1338 = vstv %s280
        %v1339 = vmul.f32 %v1025, %v1338
        %v1340 = vadd.f32 %v1337, %v1339
        %v1341 = vstv %s281
        %v1342 = vmul.f32 %v1050, %v1341
        %v1343 = vadd.f32 %v1340, %v1342
        %v1344 = vstv %s282
        %v1345 = vmul.f32 %v1075, %v1344
        %v1346 = vadd.f32 %v1343, %v1345
        %v1348 = vlaneseq
        %v1349 = vshrl.u32 %v1348, 7
        %v1350 = vsub.s32 0, %v1349
        %v1351 = vrot.slane %v1346, %v1350
        %v1352 = vlaneseq
        %v1353 = vshrl.u32 %v1352, 7
        %v1354 = vsub.s32 1, %v1353
        %v1355 = vrot.slane %v1346, %v1354
        %1358 = vrot.lane.b32.xlu0 %v1351, 112
        %v1359 = vpop.permute.xlu0 %1358
        %1360 = vrot.lane.b32.xlu0 %v1355, 112
        %v1361 = vpop.permute.xlu0 %1360
        %v1362 = vsel %vm791, %v1359, %v1361
        %v1363 = vsel %vm791, %v1361, %v1359
        %v1364 = vsel %vm794, %v1362, 0.0
        %v1365 = vsel %vm795, %v1363, 0.0
        %v1366 = vadd.f32 %v1306, %v1364
        %v1367 = vadd.f32 %v1307, %v1365
        %v1368 = vstv %s283
        %v1369 = vmul.f32 %v950, %v1368
        %v1370 = vstv %s284
        %v1371 = vmul.f32 %v975, %v1370
        %v1372 = vadd.f32 %v1369, %v1371
        %v1373 = vstv %s285
        %v1374 = vmul.f32 %v1000, %v1373
        %v1375 = vadd.f32 %v1372, %v1374
        %v1376 = vstv %s286
        %v1377 = vmul.f32 %v334, %v1376
        %v1378 = vmul.f32 %v335, %v1376
        %v1381 = vcombine.low %v1377, %v1378
        %v1383 = vunpack.c.l.s4 1966171168
        %v1384 = vunpack.c.0.s8 %v1383
        %v1385 = vlaneseq
        %v1386 = vshrl.u32 %v1385, 7
        %v1387 = vsub.s32 %v1384, %v1386
        %v1388 = vrot.slane %v1381, %v1387
        %v1390 = vunpack.c.l.s4 1966171168
        %v1391 = vunpack.c.0.s8 %v1390
        %v1392 = vlaneseq
        %v1393 = vshrl.u32 %v1392, 7
        %v1394 = vsub.s32 %v1391, %v1393
        %v1395 = vrot.slane %v1388, %v1394
        %v1397 = vadd.f32 %v1375, %v1395
        %v1398 = vstv %s287
        %v1399 = vmul.f32 %v1025, %v1398
        %v1400 = vadd.f32 %v1397, %v1399
        %v1401 = vstv %s288
        %v1402 = vmul.f32 %v1050, %v1401
        %v1403 = vadd.f32 %v1400, %v1402
        %v1404 = vstv %s289
        %v1405 = vmul.f32 %v1075, %v1404
        %v1406 = vadd.f32 %v1403, %v1405
        %v1408 = vlaneseq
        %v1409 = vshrl.u32 %v1408, 7
        %v1410 = vsub.s32 0, %v1409
        %v1411 = vrot.slane %v1406, %v1410
        %v1412 = vlaneseq
        %v1413 = vshrl.u32 %v1412, 7
        %v1414 = vsub.s32 1, %v1413
        %v1415 = vrot.slane %v1406, %v1414
        %1418 = vrot.lane.b32.xlu0 %v1411, 96
        %v1419 = vpop.permute.xlu0 %1418
        %1420 = vrot.lane.b32.xlu0 %v1415, 96
        %v1421 = vpop.permute.xlu0 %1420
        %v1422 = vsel %vm854, %v1419, %v1421
        %v1423 = vsel %vm854, %v1421, %v1419
        %v1424 = vsel %vm857, %v1422, 0.0
        %v1425 = vsel %vm858, %v1423, 0.0
        %v1426 = vadd.f32 %v1366, %v1424
        %v1427 = vadd.f32 %v1367, %v1425
        %v1428 = vstv %s290
        %v1429 = vmul.f32 %v950, %v1428
        %v1430 = vstv %s291
        %v1431 = vmul.f32 %v975, %v1430
        %v1432 = vadd.f32 %v1429, %v1431
        %v1433 = vstv %s292
        %v1434 = vmul.f32 %v1000, %v1433
        %v1435 = vadd.f32 %v1432, %v1434
        %v1436 = vstv %s293
        %v1437 = vmul.f32 %v334, %v1436
        %v1438 = vmul.f32 %v335, %v1436
        %v1441 = vcombine.low %v1437, %v1438
        %v1443 = vunpack.c.l.s4 1966171168
        %v1444 = vunpack.c.0.s8 %v1443
        %v1445 = vlaneseq
        %v1446 = vshrl.u32 %v1445, 7
        %v1447 = vsub.s32 %v1444, %v1446
        %v1448 = vrot.slane %v1441, %v1447
        %v1450 = vunpack.c.l.s4 1966171168
        %v1451 = vunpack.c.0.s8 %v1450
        %v1452 = vlaneseq
        %v1453 = vshrl.u32 %v1452, 7
        %v1454 = vsub.s32 %v1451, %v1453
        %v1455 = vrot.slane %v1448, %v1454
        %v1457 = vadd.f32 %v1435, %v1455
        %v1458 = vstv %s294
        %v1459 = vmul.f32 %v1025, %v1458
        %v1460 = vadd.f32 %v1457, %v1459
        %v1461 = vstv %s295
        %v1462 = vmul.f32 %v1050, %v1461
        %v1463 = vadd.f32 %v1460, %v1462
        %v1464 = vstv %s296
        %v1465 = vmul.f32 %v1075, %v1464
        %v1466 = vadd.f32 %v1463, %v1465
        %v1468 = vlaneseq
        %v1469 = vshrl.u32 %v1468, 7
        %v1470 = vsub.s32 0, %v1469
        %v1471 = vrot.slane %v1466, %v1470
        %v1472 = vlaneseq
        %v1473 = vshrl.u32 %v1472, 7
        %v1474 = vsub.s32 1, %v1473
        %v1475 = vrot.slane %v1466, %v1474
        %1478 = vrot.lane.b32.xlu0 %v1471, 80
        %v1479 = vpop.permute.xlu0 %1478
        %1480 = vrot.lane.b32.xlu0 %v1475, 80
        %v1481 = vpop.permute.xlu0 %1480
        %v1482 = vsel %vm917, %v1479, %v1481
        %v1483 = vsel %vm917, %v1481, %v1479
        %v1484 = vsel %vm920, %v1482, 0.0
        %v1485 = vsel %vm921, %v1483, 0.0
        %v1486 = vadd.f32 %v1426, %v1484
        %v1487 = vadd.f32 %v1427, %v1485
        %v1488 = vlaneseq
        %v1489 = vshrl.u32 %v1488, 7
        %v1490 = vsub.s32 0, %v1489
        %v1491 = vrot.slane %v1486, %v1490
        %v1492 = vlaneseq
        %v1493 = vshrl.u32 %v1492, 7
        %v1494 = vsub.s32 0, %v1493
        %v1495 = vrot.slane %v1487, %v1494
        %v1498 = vcombine.low %v1491, %v1495
        %v1500 = vmul.f32 %v301, %v1498
        %1501 = vst [vmem:[%s198] sm:$0xff] %v1500
        %s1502 = sand.u32 %s97, 1
        %s1503 = scalar_lea.sflag [#allocation4], %s1502
        %s1504 = sand.u32 %s97, 1
        %s1505 = smul.addr %s1504, 8
        %s1506 = scalar_lea.vmem [#allocation7], %s1505
        // Predicated region
        $region41: #{tpu_custom_call.1} parent=31 // pred_check
          %p1507 = pneg %p107
        $region42: #{tpu_custom_call.1} parent=31 // pred_check_branch
          %1509 = sbr.rel (%p1507) target = $region44
        $region43: #{tpu_custom_call.1} parent=31 // pred_region
          %s1511 = ssub.s32 128, 128
          %1512 = vsyncadd %s1503, %s1511
          %s1513 = smul.addr %s21, 2
          %s1514 = smul.addr %s1513, 64
          %s1515 = scalar_lea.hbm %s3, %s1514
          %s1517 = sshll.u32 %s1506, 4
          %s1518 = int_to_ptr.vmem [resolvable:$true] %s1517
          %1520 = dma.vmem_to_hbm [thread:$0]  %s1518, 128, %s1515, %s1503
        $region44: #{tpu_custom_call.1} parent=31 // pred_fallthru
          _
      $region32: #{tpu_custom_call.1} parent=5 // pred_fallthru
        _
      %p1521 = scmp.le.s32.totalorder 2, %s16
      // Predicated region
      $region45: #{tpu_custom_call.1} parent=5 // pred_check
        %p1522 = pneg %p1521
      $region46: #{tpu_custom_call.1} parent=5 // pred_check_branch
        %1524 = sbr.rel (%p1522) target = $region48
      $region47: #{tpu_custom_call.1} parent=5 // pred_region
        %s1525 = ssub.s32 %s16, 2
        // Predicated region
        $region49: #{tpu_custom_call.1} parent=47 // pred_check
          %p1526 = pneg %p113
        $region50: #{tpu_custom_call.1} parent=47 // pred_check_branch
          %1528 = sbr.rel (%p1526) target = $region52
        $region51: #{tpu_custom_call.1} parent=47 // pred_region
          %s1529 = sand.u32 %s98, 1
          %s1530 = scalar_lea.sflag [#allocation4], %s1529
          %s1531 = sand.u32 %s98, 1
          %s1532 = smul.addr %s1531, 8
          %s1533 = scalar_lea.vmem [#allocation7], %s1532
          %1534 = dma.done %s1530, 128
        $region52: #{tpu_custom_call.1} parent=47 // pred_fallthru
          _
      $region48: #{tpu_custom_call.1} parent=5 // pred_fallthru
        _
    $region6: #{tpu_custom_call.1} parent=1 // loop_footer
      %s20 = sadd.s32 1, %s16
    $region7: #{tpu_custom_call.1} parent=1 // loop_footer_branch
      %15 = sbr.rel target = $region3
    $region8: #{tpu_custom_call.1} parent=1 // loop_exit
      _
    %1535 = vsyncpa [#allocation3], 1
    %s1536 = scalar_lea.sflag [#allocation3], 1
    %1537 = vsyncpa %s1536, 1
    %1538 = vsyncpa [#allocation4], 1
    %s1539 = scalar_lea.sflag [#allocation4], 1
    %1540 = vsyncpa %s1539, 1
    %1541 = vsyncpa [#allocation5], 1
    %s1542 = scalar_lea.sflag [#allocation5], 1
    %1543 = vsyncpa %s1542, 1

</llo_original>
